<compile_context>
chip_gen: v6e
topology: v6e:2x2x1
jax: 0.10.0
libtpu: 0.0.40
codegen_flags: <defaults>
</compile_context>

<pallas_src>
from collections.abc import Iterable

import numpy as np
import jax
import jax.numpy as jnp
from jax.experimental import pallas as pl
from jax.experimental.pallas import tpu as pltpu


def _ntuple(v, n):
    if isinstance(v, Iterable):
        return tuple(v)
    return (v,) * n


def _divisors(n):
    return [d for d in range(1, n + 1) if n % d == 0]


def _maybe_pad_to_lanes(c, lanes=128):
    """Round channel counts >= one lane tile up to a multiple of 128."""
    if c < lanes or c % lanes == 0:
        return c
    return ((c + lanes - 1) // lanes) * lanes


def _dense_tap_weights(w, groups):
    """w: (C_out, C_in//groups, k) -> (k, C_in, C_out) dense, block-diag over groups.

    Pure jnp (traceable under jit / abstract weights).
    """
    c_out, c_in_g, k = w.shape
    c_out_g = c_out // groups
    wg = w.reshape(groups, c_out_g, c_in_g, k).astype(jnp.float32)
    wg = jnp.transpose(wg, (3, 0, 2, 1))                      # (k, g, ci, co)
    eye = jnp.eye(groups, dtype=jnp.float32)
    full = jnp.einsum('kgio,gh->kgiho', wg, eye)              # (k, g, ci, g', co)
    return full.reshape(k, groups * c_in_g, c_out)


def _tpu_config():
    """Generation-aware VMEM budget / limit / TensorCore count heuristics."""
    kind = ""
    try:
        kind = jax.devices()[0].device_kind.lower()
    except Exception:
        pass
    if "v2" in kind or "v3" in kind:
        return {"budget": 6 << 20, "vmem_limit": 14 << 20, "cores": 2}
    if "v4" in kind or "v5" in kind or "v6" in kind:
        # 128 MiB physical VMEM; v5e/v5p/v6e drive the grid from one TC.
        cores = 2 if "v4" in kind else 1
        return {"budget": 48 << 20, "vmem_limit": 100 << 20, "cores": cores}
    # v7x (64 MiB VMEM per TC, 2 TCs) or unknown: stay conservative.
    return {"budget": 20 << 20, "vmem_limit": 48 << 20, "cores": 2}


def _choose_blocks(n, h_out, *, bytes_fn, budget, cores,
                   block_batch=None, block_rows=None):
    """Pick (batch_block, row_block).  Row tiling (kh-1 halo) only kicks in
    when a single image's working set exceeds the VMEM budget."""
    if block_rows is not None:
        th = int(block_rows)
        if h_out % th:
            raise ValueError("block_rows must divide the output height")
    else:
        th = 1
        for d in sorted(_divisors(h_out), reverse=True):
            if bytes_fn(1, d) <= budget:
                th = d
                break
    n_total = n * (h_out // th)

    if block_batch is not None:
        bb = int(block_batch)
        if n_total % bb:
            raise ValueError("block_batch must divide batch * row-block count")
        return bb, th

    cands = [d for d in _divisors(n_total) if bytes_fn(d, th) <= budget]
    if not cands:
        return 1, th
    if cores > 1 and n_total >= 2:
        multi = [d for d in cands if n_total // d >= 2]       # keep both TCs busy
        if multi:
            cands = multi
        even = [d for d in cands if (n_total // d) % cores == 0]
        if even:                                              # avoid odd-step tail
            return max(even), th
    return max(cands), th


def _make_kernel(kh, kw, ch, cw, bb, th_out, w_out, c_in, c_out, fat_k):
    m = bb * th_out * w_out
    n_taps = kh + kw

    def kernel(x_ref, w_ref, b_ref, o_ref):
        # x_ref: (bb, th_in, w_pad, c_in)  NHWC row band (halo rows included)
        # w_ref: (n_taps*c_in, c_out) if fat_k else (n_taps, c_in, c_out)
        # b_ref: (1, c_out) f32 combined bias
        # o_ref: (bb, th_out*w_out, c_out) lane-dense flat output
        # Hoisted, tap-invariant crops (shared by all vertical / horizontal taps).
        x_v = x_ref[:, :, cw:cw + w_out, :]        # (bb, th_in, w_out, c_in)
        x_h = x_ref[:, ch:ch + th_out, :, :]       # (bb, th_out, w_pad, c_in)
        parts = [x_v[:, dy:dy + th_out, :, :] for dy in range(kh)]
        parts += [x_h[:, :, dx:dx + w_out, :] for dx in range(kw)]

        if fat_k:
            # Single fat-K MXU pass: K = (kh+kw)*c_in (channel segments are
            # 128-lane aligned, so the concatenate is tile-aligned).
            xcat = jnp.concatenate(parts, axis=-1).reshape(m, n_taps * c_in)
            acc = jnp.dot(xcat, w_ref[...], preferred_element_type=jnp.float32)
            acc = acc + b_ref[...]
        else:
            # Tiny / lane-unaligned channels: per-tap matmuls, bias-initialised
            # accumulator (saves one full (M, C_out) VPU pass).
            acc = jnp.broadcast_to(b_ref[...], (m, c_out)).astype(jnp.float32)
            for t, part in enumerate(parts):
                acc = acc + jnp.dot(part.reshape(m, c_in), w_ref[t],
                                    preferred_element_type=jnp.float32)

        o_ref[...] = acc.reshape(bb, th_out * w_out, c_out).astype(o_ref.dtype)

    return kernel


def _conv2d_ch_stride1(x, w_v, w_h, bias, *, padding, groups, compute_dtype,
                       block_batch, block_rows):
    n, c_in, h, w = x.shape
    c_out = int(w_v.shape[0])
    kh, kw = int(w_v.shape[2]), int(w_h.shape[3])
    ph, pw = padding
    ch_, cw_ = (kh - 1) // 2, (kw - 1) // 2
    h_pad, w_pad = h + 2 * ph, w + 2 * pw
    h_out, w_out = h_pad - kh + 1, w_pad - kw + 1
    n_taps = kh + kw

    # Per-tap dense (C_in, C_out) mixing matrices.
    wv_taps = _dense_tap_weights(w_v[:, :, :, 0], groups)     # (kh, C_in, C_out)
    wh_taps = _dense_tap_weights(w_h[:, :, 0, :], groups)     # (kw, C_in, C_out)
    w_taps = jnp.concatenate([wv_taps, wh_taps], axis=0)      # (n_taps, C_in, C_out)

    # Optional 128-lane channel padding (only large, unaligned channel counts).
    c_in_p, c_out_p = _maybe_pad_to_lanes(c_in), _maybe_pad_to_lanes(c_out)
    if (c_in_p, c_out_p) != (c_in, c_out):
        w_taps = jnp.pad(w_taps, ((0, 0), (0, c_in_p - c_in), (0, c_out_p - c_out)))
    bias_p = jnp.pad(bias.astype(jnp.float32), (0, c_out_p - c_out)).reshape(1, c_out_p)

    # Fat-K single-matmul path only when channel segments are lane-tile aligned.
    fat_k = (c_in_p % 128 == 0)
    k_total = n_taps * c_in_p
    if fat_k:
        w_all = w_taps.reshape(k_total, c_out_p).astype(compute_dtype)
        w_spec = pl.BlockSpec((k_total, c_out_p), lambda i: (0, 0))
    else:
        w_all = w_taps.astype(compute_dtype)
        w_spec = pl.BlockSpec((n_taps, c_in_p, c_out_p), lambda i: (0, 0, 0))

    # NCHW -> NHWC, spatial zero pad, channel pad, compute dtype (bf16 default:
    # faster MXU passes and half the HBM/VMEM input traffic; accumulation f32).
    x_nhwc = jnp.transpose(x, (0, 2, 3, 1))
    x_nhwc = jnp.pad(x_nhwc, ((0, 0), (ph, ph), (pw, pw), (0, c_in_p - c_in)))
    x_nhwc = x_nhwc.astype(compute_dtype)

    in_item = jnp.dtype(compute_dtype).itemsize
    out_item = jnp.dtype(x.dtype).itemsize

    def bytes_fn(bb, th):
        # Per-grid-step working set: double-buffered in/out tiles + weights,
        # hoisted slice copies, materialised (M, K) slab, f32 accumulator.
        th_in = th + kh - 1
        hw = th * w_out
        in_tile = bb * th_in * w_pad * c_in_p * in_item
        out_tile = bb * hw * c_out_p * out_item
        slices = bb * (th_in * w_out + th * w_pad) * c_in_p * in_item
        slab = bb * hw * k_total * in_item
        acc = bb * hw * c_out_p * 4
        wbytes = k_total * c_out_p * in_item + c_out_p * 4
        return 2 * (in_tile + out_tile + wbytes) + slices + slab + acc

    cfg = _tpu_config()
    bb, th_out = _choose_blocks(n, h_out, bytes_fn=bytes_fn, budget=cfg["budget"],
                                cores=cfg["cores"], block_batch=block_batch,
                                block_rows=block_rows)
    th_in = th_out + kh - 1
    n_hb = h_out // th_out
    n_total = n * n_hb

    # Overlapping H row-bands built in the wrapper: the kh-1 halo is baked into
    # each band, so the kernel needs only vanilla Blocked BlockSpecs.
    bands = [x_nhwc[:, r * th_out:r * th_out + th_in] for r in range(n_hb)]
    x_band = jnp.stack(bands, axis=1).reshape(n_total, th_in, w_pad, c_in_p)

    kernel = _make_kernel(kh, kw, ch_, cw_, bb, th_out, w_out, c_in_p, c_out_p,
                          fat_k)

    out_flat = pl.pallas_call(
        kernel,
        out_shape=jax.ShapeDtypeStruct((n_total, th_out * w_out, c_out_p), x.dtype),
        grid_spec=pltpu.PrefetchScalarGridSpec(
            num_scalar_prefetch=0,
            grid=(n_total // bb,),
            in_specs=[
                pl.BlockSpec((bb, th_in, w_pad, c_in_p), lambda i: (i, 0, 0, 0)),
                w_spec,
                pl.BlockSpec((1, c_out_p), lambda i: (0, 0)),
            ],
            out_specs=pl.BlockSpec((bb, th_out * w_out, c_out_p),
                                   lambda i: (i, 0, 0)),
        ),
        compiler_params=pltpu.CompilerParams(
            dimension_semantics=("parallel",),
            vmem_limit_bytes=cfg["vmem_limit"],
        ),
    )(x_band, w_all, bias_p)

    out = out_flat.reshape(n, h_out, w_out, c_out_p)[..., :c_out]
    return jnp.transpose(out, (0, 3, 1, 2))


def conv2d_ch(x, w_v, w_h, b_v=None, b_h=None, *, stride=1, padding=None,
              groups=1, padding_mode='zeros', compute_dtype=jnp.bfloat16,
              block_batch=None, block_rows=None):
    """Pallas forward of Conv2dCH: conv1d_v(x) + conv1d_h(x).

    x: (N, C_in, H, W); w_v: (C_out, C_in//groups, kh, 1);
    w_h: (C_out, C_in//groups, 1, kw); b_v, b_h: (C_out,) or None.
    """
    if padding_mode != 'zeros':
        # TODO(synk): only zero padding is implemented.
        raise NotImplementedError("padding_mode != 'zeros' is not supported")

    kh, kw = int(w_v.shape[2]), int(w_h.shape[3])
    if kh % 2 == 0 or kw % 2 == 0:
        raise ValueError("Even kernel sizes are not supported")

    sh, sw = _ntuple(stride, 2)
    pad = list(_ntuple(padding, 2)) if padding is not None else [None, None]
    ph = (kh - 1) // 2 if pad[0] is None else int(pad[0])
    pw = (kw - 1) // 2 if pad[1] is None else int(pad[1])
    if ph < (kh - 1) // 2 or pw < (kw - 1) // 2:
        raise ValueError("padding must be >= (kernel_size - 1) // 2")

    c_out = int(w_v.shape[0])
    zero = jnp.zeros((c_out,), dtype=jnp.float32)
    bias = ((b_v if b_v is not None else zero).astype(jnp.float32)
            + (b_h if b_h is not None else zero).astype(jnp.float32))

    out = _conv2d_ch_stride1(x, w_v, w_h, bias, padding=(ph, pw), groups=groups,
                             compute_dtype=compute_dtype,
                             block_batch=block_batch, block_rows=block_rows)
    if (sh, sw) != (1, 1):
        # TODO(synk): stride applied by subsampling the stride-1 output; a native
        #             strided kernel would subsample before the store.
        out = out[:, :, ::sh, ::sw]
    return out


def _reference_conv2dch(x, w_v, w_h, b_v, b_h, stride, padding, groups):
    """Pure-JAX reference matching the PyTorch Conv2dCH forward."""
    kh, kw = int(w_v.shape[2]), int(w_h.shape[3])
    sh, sw = stride
    ph, pw = padding
    dn = jax.lax.conv_dimension_numbers(x.shape, w_v.shape, ('NCHW', 'OIHW', 'NCHW'))
    out_v = jax.lax.conv_general_dilated(
        x, w_v, (sh, sw), ((ph, ph), (pw - (kw - 1) // 2,) * 2),
        dimension_numbers=dn, feature_group_count=groups,
        precision=jax.lax.Precision.HIGHEST)
    out_h = jax.lax.conv_general_dilated(
        x, w_h, (sh, sw), ((ph - (kh - 1) // 2,) * 2, (pw, pw)),
        dimension_numbers=dn, feature_group_count=groups,
        precision=jax.lax.Precision.HIGHEST)
    return out_v + out_h + (b_v + b_h)[None, :, None, None]


if __name__ == "__main__":
    key = jax.random.PRNGKey(0)
    k_x, k_wv, k_wh, k_bv, k_bh, k_x4, k_w4 = jax.random.split(key, 7)

    def bf16(a):
        return a.astype(jnp.bfloat16).astype(jnp.float32)

    n, c_in, c_out, h, w = 2, 4, 8, 16, 16
    x = jax.random.normal(k_x, (n, c_in, h, w), dtype=jnp.float32)
    b_v = jax.random.normal(k_bv, (c_out,), dtype=jnp.float32) * 0.1
    b_h = jax.random.normal(k_bh, (c_out,), dtype=jnp.float32) * 0.1

    # --- config 1: kernel 3, "same" padding, groups=1, f32 compute (tight check) ---
    w_v = jax.random.normal(k_wv, (c_out, c_in, 3, 1), dtype=jnp.float32) * 0.2
    w_h = jax.random.normal(k_wh, (c_out, c_in, 1, 3), dtype=jnp.float32) * 0.2
    out = jax.block_until_ready(
        conv2d_ch(x, w_v, w_h, b_v, b_h, compute_dtype=jnp.float32))
    ref = _reference_conv2dch(x, w_v, w_h, b_v, b_h, (1, 1), (1, 1), 1)
    assert out.shape == (n, c_out, h, w), out.shape
    np.testing.assert_allclose(np.asarray(out), np.asarray(ref),
                               rtol=1e-3, atol=1e-3)

    # --- config 2: kernel (3,5), padding (2,3), groups=2, bf16 compute (default) ---
    w_v2 = jax.random.normal(k_wv, (c_out, c_in // 2, 3, 1), dtype=jnp.float32) * 0.2
    w_h2 = jax.random.normal(k_wh, (c_out, c_in // 2, 1, 5), dtype=jnp.float32) * 0.2
    out2 = jax.block_until_ready(
        conv2d_ch(x, w_v2, w_h2, b_v, b_h, padding=(2, 3), groups=2))
    ref2 = _reference_conv2dch(bf16(x), bf16(w_v2), bf16(w_h2), b_v, b_h,
                               (1, 1), (2, 3), 2)
    assert out2.shape == ref2.shape, (out2.shape, ref2.shape)
    np.testing.assert_allclose(np.asarray(out2), np.asarray(ref2),
                               rtol=2e-3, atol=2e-3)

    # --- config 3: forced H-row tiling (halo bands) + stride 2, bf16 ---
    out3 = jax.block_until_ready(
        conv2d_ch(x, w_v, w_h, b_v, b_h, stride=2, block_batch=1, block_rows=4))
    ref3 = _reference_conv2dch(bf16(x), bf16(w_v), bf16(w_h), b_v, b_h,
                               (2, 2), (1, 1), 1)
    assert out3.shape == ref3.shape, (out3.shape, ref3.shape)
    np.testing.assert_allclose(np.asarray(out3), np.asarray(ref3),
                               rtol=2e-3, atol=2e-3)

    # --- config 4: 128-lane-aligned channels -> single fat-K matmul path ---
    cb = 128
    x4 = jax.random.normal(k_x4, (n, cb, h, w), dtype=jnp.float32)
    w_v4 = jax.random.normal(k_w4, (cb, cb, 3, 1), dtype=jnp.float32) * 0.05
    w_h4 = jax.random.normal(k_w4, (cb, cb, 1, 3), dtype=jnp.float32) * 0.05
    b4 = jnp.zeros((cb,), dtype=jnp.float32)
    out4 = jax.block_until_ready(conv2d_ch(x4, w_v4, w_h4, b4, b4))
    ref4 = _reference_conv2dch(bf16(x4), bf16(w_v4), bf16(w_h4), b4, b4,
                               (1, 1), (1, 1), 1)
    assert out4.shape == (n, cb, h, w), out4.shape
    np.testing.assert_allclose(np.asarray(out4), np.asarray(ref4),
                               rtol=2e-3, atol=2e-3)

    print("KERNEL_OK")
</pallas_src>

<mosaic_0001>
module attributes {stable_mosaic.version = 11 : i64} {
  func.func @kernel(%arg0: i32, %arg1: memref<1x18x18x4xf32, #tpu.memory_space<vmem>>, %arg2: memref<6x4x8xf32, #tpu.memory_space<vmem>>, %arg3: memref<1x8xf32, #tpu.memory_space<vmem>>, %arg4: memref<1x256x8xf32, #tpu.memory_space<vmem>>) attributes {dimension_semantics = [#tpu.dimension_semantics<parallel>], iteration_bounds = array<i64: 2>, scalar_prefetch = 0 : i64, scratch_operands = 0 : i64, tpu.core_type = #tpu.core_type<tc>, window_params = [{transform_indices = @transform_0, window_bounds = array<i64: 1, 18, 18, 4>}, {pipeline_mode = #tpu.pipeline_mode<synchronous>, transform_indices = @transform_1, window_bounds = array<i64: 6, 4, 8>}, {pipeline_mode = #tpu.pipeline_mode<synchronous>, transform_indices = @transform_2, window_bounds = array<i64: 1, 8>}, {transform_indices = @transform_3, window_bounds = array<i64: 1, 256, 8>}]} {
    %c0 = arith.constant 0 : index
    %c0_0 = arith.constant 0 : index
    %c1 = arith.constant 1 : index
    %c0_1 = arith.constant 0 : index
    %0 = vector.load %arg1[%c0, %c0_0, %c1, %c0_1] : memref<1x18x18x4xf32, #tpu.memory_space<vmem>>, vector<1x18x16x4xf32>
    %c0_2 = arith.constant 0 : index
    %c1_3 = arith.constant 1 : index
    %c0_4 = arith.constant 0 : index
    %c0_5 = arith.constant 0 : index
    %1 = vector.load %arg1[%c0_2, %c1_3, %c0_4, %c0_5] : memref<1x18x18x4xf32, #tpu.memory_space<vmem>>, vector<1x16x18x4xf32>
    %2 = vector.extract_strided_slice %0 {offsets = [0, 0, 0, 0], sizes = [1, 16, 16, 4], strides = [1, 1, 1, 1]} : vector<1x18x16x4xf32> to vector<1x16x16x4xf32>
    %3 = vector.extract_strided_slice %0 {offsets = [0, 1, 0, 0], sizes = [1, 16, 16, 4], strides = [1, 1, 1, 1]} : vector<1x18x16x4xf32> to vector<1x16x16x4xf32>
    %4 = vector.extract_strided_slice %0 {offsets = [0, 2, 0, 0], sizes = [1, 16, 16, 4], strides = [1, 1, 1, 1]} : vector<1x18x16x4xf32> to vector<1x16x16x4xf32>
    %5 = vector.extract_strided_slice %1 {offsets = [0, 0, 0, 0], sizes = [1, 16, 16, 4], strides = [1, 1, 1, 1]} : vector<1x16x18x4xf32> to vector<1x16x16x4xf32>
    %6 = vector.extract_strided_slice %1 {offsets = [0, 0, 1, 0], sizes = [1, 16, 16, 4], strides = [1, 1, 1, 1]} : vector<1x16x18x4xf32> to vector<1x16x16x4xf32>
    %7 = vector.extract_strided_slice %1 {offsets = [0, 0, 2, 0], sizes = [1, 16, 16, 4], strides = [1, 1, 1, 1]} : vector<1x16x18x4xf32> to vector<1x16x16x4xf32>
    %c0_6 = arith.constant 0 : index
    %c0_7 = arith.constant 0 : index
    %8 = vector.load %arg3[%c0_6, %c0_7] : memref<1x8xf32, #tpu.memory_space<vmem>>, vector<1x8xf32>
    %9 = vector.shape_cast %8 : vector<1x8xf32> to vector<1x8xf32>
    %10 = vector.broadcast %9 : vector<1x8xf32> to vector<256x8xf32>
    %11 = vector.shape_cast %2 : vector<1x16x16x4xf32> to vector<256x4xf32>
    %c0_8 = arith.constant 0 : index
    %c0_9 = arith.constant 0 : index
    %c0_10 = arith.constant 0 : index
    %12 = vector.load %arg2[%c0_8, %c0_9, %c0_10] : memref<6x4x8xf32, #tpu.memory_space<vmem>>, vector<1x4x8xf32>
    %13 = vector.shape_cast %12 : vector<1x4x8xf32> to vector<4x8xf32>
    %cst = arith.constant dense<0.000000e+00> : vector<256x8xf32>
    %14 = tpu.matmul %11, %13, %cst {dimension_numbers = #tpu.dot_dimension_numbers<[1], [0], [0], [1], [0, 0, 1, 1], [], []>} : vector<256x4xf32>, vector<4x8xf32>, vector<256x8xf32> -> vector<256x8xf32>
    %15 = arith.addf %10, %14 : vector<256x8xf32>
    %16 = vector.shape_cast %3 : vector<1x16x16x4xf32> to vector<256x4xf32>
    %c1_11 = arith.constant 1 : index
    %c0_12 = arith.constant 0 : index
    %c0_13 = arith.constant 0 : index
    %17 = vector.load %arg2[%c1_11, %c0_12, %c0_13] : memref<6x4x8xf32, #tpu.memory_space<vmem>>, vector<1x4x8xf32>
    %18 = vector.shape_cast %17 : vector<1x4x8xf32> to vector<4x8xf32>
    %cst_14 = arith.constant dense<0.000000e+00> : vector<256x8xf32>
    %19 = tpu.matmul %16, %18, %cst_14 {dimension_numbers = #tpu.dot_dimension_numbers<[1], [0], [0], [1], [0, 0, 1, 1], [], []>} : vector<256x4xf32>, vector<4x8xf32>, vector<256x8xf32> -> vector<256x8xf32>
    %20 = arith.addf %15, %19 : vector<256x8xf32>
    %21 = vector.shape_cast %4 : vector<1x16x16x4xf32> to vector<256x4xf32>
    %c2 = arith.constant 2 : index
    %c0_15 = arith.constant 0 : index
    %c0_16 = arith.constant 0 : index
    %22 = vector.load %arg2[%c2, %c0_15, %c0_16] : memref<6x4x8xf32, #tpu.memory_space<vmem>>, vector<1x4x8xf32>
    %23 = vector.shape_cast %22 : vector<1x4x8xf32> to vector<4x8xf32>
    %cst_17 = arith.constant dense<0.000000e+00> : vector<256x8xf32>
    %24 = tpu.matmul %21, %23, %cst_17 {dimension_numbers = #tpu.dot_dimension_numbers<[1], [0], [0], [1], [0, 0, 1, 1], [], []>} : vector<256x4xf32>, vector<4x8xf32>, vector<256x8xf32> -> vector<256x8xf32>
    %25 = arith.addf %20, %24 : vector<256x8xf32>
    %26 = vector.shape_cast %5 : vector<1x16x16x4xf32> to vector<256x4xf32>
    %c3 = arith.constant 3 : index
    %c0_18 = arith.constant 0 : index
    %c0_19 = arith.constant 0 : index
    %27 = vector.load %arg2[%c3, %c0_18, %c0_19] : memref<6x4x8xf32, #tpu.memory_space<vmem>>, vector<1x4x8xf32>
    %28 = vector.shape_cast %27 : vector<1x4x8xf32> to vector<4x8xf32>
    %cst_20 = arith.constant dense<0.000000e+00> : vector<256x8xf32>
    %29 = tpu.matmul %26, %28, %cst_20 {dimension_numbers = #tpu.dot_dimension_numbers<[1], [0], [0], [1], [0, 0, 1, 1], [], []>} : vector<256x4xf32>, vector<4x8xf32>, vector<256x8xf32> -> vector<256x8xf32>
    %30 = arith.addf %25, %29 : vector<256x8xf32>
    %31 = vector.shape_cast %6 : vector<1x16x16x4xf32> to vector<256x4xf32>
    %c4 = arith.constant 4 : index
    %c0_21 = arith.constant 0 : index
    %c0_22 = arith.constant 0 : index
    %32 = vector.load %arg2[%c4, %c0_21, %c0_22] : memref<6x4x8xf32, #tpu.memory_space<vmem>>, vector<1x4x8xf32>
    %33 = vector.shape_cast %32 : vector<1x4x8xf32> to vector<4x8xf32>
    %cst_23 = arith.constant dense<0.000000e+00> : vector<256x8xf32>
    %34 = tpu.matmul %31, %33, %cst_23 {dimension_numbers = #tpu.dot_dimension_numbers<[1], [0], [0], [1], [0, 0, 1, 1], [], []>} : vector<256x4xf32>, vector<4x8xf32>, vector<256x8xf32> -> vector<256x8xf32>
    %35 = arith.addf %30, %34 : vector<256x8xf32>
    %36 = vector.shape_cast %7 : vector<1x16x16x4xf32> to vector<256x4xf32>
    %c5 = arith.constant 5 : index
    %c0_24 = arith.constant 0 : index
    %c0_25 = arith.constant 0 : index
    %37 = vector.load %arg2[%c5, %c0_24, %c0_25] : memref<6x4x8xf32, #tpu.memory_space<vmem>>, vector<1x4x8xf32>
    %38 = vector.shape_cast %37 : vector<1x4x8xf32> to vector<4x8xf32>
    %cst_26 = arith.constant dense<0.000000e+00> : vector<256x8xf32>
    %39 = tpu.matmul %36, %38, %cst_26 {dimension_numbers = #tpu.dot_dimension_numbers<[1], [0], [0], [1], [0, 0, 1, 1], [], []>} : vector<256x4xf32>, vector<4x8xf32>, vector<256x8xf32> -> vector<256x8xf32>
    %40 = arith.addf %35, %39 : vector<256x8xf32>
    %41 = vector.shape_cast %40 : vector<256x8xf32> to vector<1x256x8xf32>
    %c0_27 = arith.constant 0 : index
    %c0_28 = arith.constant 0 : index
    %c0_29 = arith.constant 0 : index
    %42 = vector.load %arg4[%c0_27, %c0_28, %c0_29] : memref<1x256x8xf32, #tpu.memory_space<vmem>>, vector<1x256x8xf32>
    tpu.vector_store %arg4[%c0_27, %c0_28, %c0_29], %41 {strides = array<i32>} : memref<1x256x8xf32, #tpu.memory_space<vmem>>, vector<1x256x8xf32>,
    return
  }
  func.func @transform_0(%arg0: i32) -> (i32, i32, i32, i32) {
    %c0_i32 = arith.constant 0 : i32
    %c0_i32_0 = arith.constant 0 : i32
    %c0_i32_1 = arith.constant 0 : i32
    %c0_i32_2 = arith.constant 0 : i32
    return %arg0, %c0_i32, %c0_i32_0, %c0_i32_1 : i32, i32, i32, i32
  }
  func.func @transform_1(%arg0: i32) -> (i32, i32, i32) {
    %c0_i32 = arith.constant 0 : i32
    %c0_i32_0 = arith.constant 0 : i32
    %c0_i32_1 = arith.constant 0 : i32
    %c0_i32_2 = arith.constant 0 : i32
    return %c0_i32, %c0_i32_0, %c0_i32_1 : i32, i32, i32
  }
  func.func @transform_2(%arg0: i32) -> (i32, i32) {
    %c0_i32 = arith.constant 0 : i32
    %c0_i32_0 = arith.constant 0 : i32
    %c0_i32_1 = arith.constant 0 : i32
    return %c0_i32, %c0_i32_0 : i32, i32
  }
  func.func @transform_3(%arg0: i32) -> (i32, i32, i32) {
    %c0_i32 = arith.constant 0 : i32
    %c0_i32_0 = arith.constant 0 : i32
    %c0_i32_1 = arith.constant 0 : i32
    return %arg0, %c0_i32, %c0_i32_0 : i32, i32, i32
  }
}

</mosaic_0001>

<llo_original>
// kernel: tpu_custom_call.1
$region0: #{tpu_custom_call.1}
  #allocation0 [shape = 'u32[]', space=smem, size = 0x4, offset = 0x4, fixed_abs, tag = 'smem constant byte address 0x4 - core index']
  #allocation1 [shape = 'u32[144,128]{1,0:T(1,128)}', space=vmem, size = 0x12000, scoped, tag = 'internal scratch']
  %s0 = inlined_call_operand.vmem [shape: f32[2,18,18,4], index: 0, kind: input, shape index: {}]
  %s1 = inlined_call_operand.vmem [shape: f32[6,4,8], index: 1, kind: input, shape index: {}]
  %s2 = inlined_call_operand.vmem [shape: f32[1,8], index: 2, kind: input, shape index: {}]
  %s3 = inlined_call_operand.vmem [shape: f32[2,256,8], index: 3, kind: output, shape index: {}]
  %s4 = sld [smem:[#allocation0]]
  $region45: #{tpu_custom_call.1} parent=0
    _
  %s6 = ssub.s32 1, %s4
  %s7 = scalar_select 0, %s6, %s4
  loop: start=0, step=1, limit=4
  $region2: #{tpu_custom_call.1} parent=0 // loop_pre_header
    _
  $region3: #{tpu_custom_call.1} parent=0 // loop_header
    %s9 = sphi 0, %s13
    %p10 = scmp.ge.s32.totalorder %s9, 4
    %s19 = sphi 0, %s21
    %s22 = sphi 0, %s19
    %s23 = sphi 0, %s22
    %s39 = sphi 0, %s23
    %s43 = sphi 0, %s43
    %s45 = sphi 0, %s43
    %s46 = sphi 0, %s45
    %s60 = sphi 0, %s46
    %s64 = sphi 0, %s64
    %s66 = sphi 0, %s64
    %s67 = sphi 0, %s66
    %s81 = sphi 0, %s67
    %s87 = sphi 0, %s89
    %s90 = sphi 0, %s87
    %s91 = sphi 0, %s90
    %s107 = sphi 0, %s91
  $region4: #{tpu_custom_call.1} parent=0 // loop_header_branch
    %12 = sbr.rel (%p10) target = $region8
  $region5: #{tpu_custom_call.1} parent=0 // loop_body
    %s14 = ssub.s32 %s9, 1
    %s15 = ssub.s32 %s9, 2
    %s16 = sadd.s32 %s9, 1
    %s17 = ssub.s32 %s9, %s16
    %p18 = scmp.eq.s32.totalorder %s17, 0
    %s20 = sadd.s32 %s19, 1
    %s21 = scalar_select %p18, %s19, %s20
    %p24 = pneg %p18
    %p25 = scmp.eq.s32.totalorder %s9, 1
    %p26 = por %p24, %p25
    %p27 = scmp.ne.s32.totalorder %s19, %s22
    %p28 = scmp.eq.s32.totalorder %s9, 0
    %p29 = por %p27, %p28
    %p30 = scmp.ne.s32.totalorder %s19, %s22
    %p31 = scmp.eq.s32.totalorder %s14, 1
    %p32 = por %p30, %p31
    %p33 = scmp.ne.s32.totalorder %s22, %s23
    %p34 = scmp.eq.s32.totalorder %s14, 0
    %p35 = por %p33, %p34
    %p36 = scmp.ne.s32.totalorder %s22, %s23
    %p37 = scmp.eq.s32.totalorder %s15, 1
    %p38 = por %p36, %p37
    %p40 = scmp.ne.s32.totalorder %s23, %s39
    %p41 = scmp.eq.s32.totalorder %s15, 0
    %p42 = por %p40, %p41
    %s44 = sadd.s32 %s43, 1
    %p47 = scmp.eq.s32.totalorder %s9, 1
    %p48 = scmp.ne.s32.totalorder %s43, %s45
    %p49 = scmp.eq.s32.totalorder %s9, 0
    %p50 = por %p48, %p49
    %p51 = scmp.ne.s32.totalorder %s43, %s45
    %p52 = scmp.eq.s32.totalorder %s14, 1
    %p53 = por %p51, %p52
    %p54 = scmp.ne.s32.totalorder %s45, %s46
    %p55 = scmp.eq.s32.totalorder %s14, 0
    %p56 = por %p54, %p55
    %p57 = scmp.ne.s32.totalorder %s45, %s46
    %p58 = scmp.eq.s32.totalorder %s15, 1
    %p59 = por %p57, %p58
    %p61 = scmp.ne.s32.totalorder %s46, %s60
    %p62 = scmp.eq.s32.totalorder %s15, 0
    %p63 = por %p61, %p62
    %s65 = sadd.s32 %s64, 1
    %p68 = scmp.eq.s32.totalorder %s9, 1
    %p69 = scmp.ne.s32.totalorder %s64, %s66
    %p70 = scmp.eq.s32.totalorder %s9, 0
    %p71 = por %p69, %p70
    %p72 = scmp.ne.s32.totalorder %s64, %s66
    %p73 = scmp.eq.s32.totalorder %s14, 1
    %p74 = por %p72, %p73
    %p75 = scmp.ne.s32.totalorder %s66, %s67
    %p76 = scmp.eq.s32.totalorder %s14, 0
    %p77 = por %p75, %p76
    %p78 = scmp.ne.s32.totalorder %s66, %s67
    %p79 = scmp.eq.s32.totalorder %s15, 1
    %p80 = por %p78, %p79
    %p82 = scmp.ne.s32.totalorder %s67, %s81
    %p83 = scmp.eq.s32.totalorder %s15, 0
    %p84 = por %p82, %p83
    %s85 = ssub.s32 %s9, %s16
    %p86 = scmp.eq.s32.totalorder %s85, 0
    %s88 = sadd.s32 %s87, 1
    %s89 = scalar_select %p86, %s87, %s88
    %p92 = pneg %p86
    %p93 = scmp.eq.s32.totalorder %s9, 1
    %p94 = por %p92, %p93
    %p95 = scmp.ne.s32.totalorder %s87, %s90
    %p96 = scmp.eq.s32.totalorder %s9, 0
    %p97 = por %p95, %p96
    %p98 = scmp.ne.s32.totalorder %s87, %s90
    %p99 = scmp.eq.s32.totalorder %s14, 1
    %p100 = por %p98, %p99
    %p101 = scmp.ne.s32.totalorder %s90, %s91
    %p102 = scmp.eq.s32.totalorder %s14, 0
    %p103 = por %p101, %p102
    %p104 = scmp.ne.s32.totalorder %s90, %s91
    %p105 = scmp.eq.s32.totalorder %s15, 1
    %p106 = por %p104, %p105
    %p108 = scmp.ne.s32.totalorder %s91, %s107
    %p109 = scmp.eq.s32.totalorder %s15, 0
    %p110 = por %p108, %p109
    %p111 = scmp.le.s32.totalorder 1, %s9
    %p112 = scmp.lt.s32.totalorder %s9, 3
    %p113 = pnand %p111, %p112
    %p114 = pneg %p113
    // Predicated region
    $region9: #{tpu_custom_call.1} parent=5 // pred_check
      _
    $region10: #{tpu_custom_call.1} parent=5 // pred_check_branch
      %116 = sbr.rel (%p113) target = $region12
    $region11: #{tpu_custom_call.1} parent=5 // pred_region
      %s117 = ssub.s32 %s9, 1
      // Predicated region
      $region13: #{tpu_custom_call.1} parent=11 // pred_check
        %p118 = pneg %p56
      $region14: #{tpu_custom_call.1} parent=11 // pred_check_branch
        %120 = sbr.rel (%p118) target = $region16
      $region15: #{tpu_custom_call.1} parent=11 // pred_region
        _
      $region16: #{tpu_custom_call.1} parent=11 // pred_fallthru
        _
      // Predicated region
      $region17: #{tpu_custom_call.1} parent=11 // pred_check
        %p121 = pneg %p77
      $region18: #{tpu_custom_call.1} parent=11 // pred_check_branch
        %123 = sbr.rel (%p121) target = $region20
      $region19: #{tpu_custom_call.1} parent=11 // pred_region
        _
      $region20: #{tpu_custom_call.1} parent=11 // pred_fallthru
        _
    $region12: #{tpu_custom_call.1} parent=5 // pred_fallthru
      _
    %p124 = scmp.lt.s32.totalorder %s9, 2
    // Predicated region
    $region21: #{tpu_custom_call.1} parent=5 // pred_check
      %p125 = pneg %p124
    $region22: #{tpu_custom_call.1} parent=5 // pred_check_branch
      %127 = sbr.rel (%p125) target = $region24
    $region23: #{tpu_custom_call.1} parent=5 // pred_region
      // Predicated region
      $region25: #{tpu_custom_call.1} parent=23 // pred_check
        %p128 = pneg %p29
      $region26: #{tpu_custom_call.1} parent=23 // pred_check_branch
        %130 = sbr.rel (%p128) target = $region28
      $region27: #{tpu_custom_call.1} parent=23 // pred_region
        %p131 = scmp.lt.s32.totalorder %s9, 1
        %s132 = scalar_select %p131, %s9, 1
        %s133 = smul.addr %s132, 54
        %s134 = smul.addr %s133, 8
        %s135 = scalar_lea.vmem %s0, %s134
      $region28: #{tpu_custom_call.1} parent=23 // pred_fallthru
        _
    $region24: #{tpu_custom_call.1} parent=5 // pred_fallthru
      _
    %p136 = scmp.le.s32.totalorder 1, %s9
    %p137 = scmp.lt.s32.totalorder %s9, 3
    %p138 = pnand %p136, %p137
    %p139 = pneg %p138
    // Predicated region
    $region29: #{tpu_custom_call.1} parent=5 // pred_check
      _
    $region30: #{tpu_custom_call.1} parent=5 // pred_check_branch
      %141 = sbr.rel (%p138) target = $region32
    $region31: #{tpu_custom_call.1} parent=5 // pred_region
      %s142 = ssub.s32 %s9, 1
      %p143 = scmp.lt.s32.totalorder %s14, 1
      %s144 = scalar_select %p143, %s14, 1
      %s145 = smul.addr %s144, 54
      %s146 = smul.addr %s145, 8
      %s147 = scalar_lea.vmem %s0, %s146
      %p148 = pneg %p35
      %p149 = pneg %p32
      %p150 = pneg %p56
      %p151 = pneg %p53
      %p152 = pneg %p77
      %p153 = pneg %p74
      %p154 = pneg %p103
      %p155 = pneg %p100
      %p156 = scmp.lt.s32.totalorder %s14, 1
      %s157 = scalar_select %p156, %s14, 1
      %s158 = smul.addr %s157, 32
      %s159 = smul.addr %s158, 8
      %s160 = scalar_lea.vmem %s3, %s159
      %p161 = scmp.lt.s32.totalorder %s14, 1
      %s162 = scalar_select %p161, %s14, 1
      %s163 = smul.addr %s162, 54
      %s164 = smul.addr %s163, 8
      %s165 = scalar_lea.vmem %s0, %s164
      %p166 = scmp.lt.s32.totalorder %s14, 1
      %s167 = scalar_select %p166, %s14, 1
      %s168 = smul.addr %s167, 32
      %s169 = smul.addr %s168, 8
      %s170 = scalar_lea.vmem %s3, %s169
      %v171 = vld [vmem:[%s165 + $0x1] sm:$0xff]
      %v172 = vld [vmem:[%s165 + $0x9] sm:$0xff]
      %v173 = vld [vmem:[%s165 + $0x19] sm:$0xff]
      %v174 = vld [vmem:[%s165 + $0x21] sm:$0xff]
      %v175 = vld [vmem:[%s165 + $0x31] sm:$0xff]
      %v176 = vld [vmem:[%s165 + $0x39] sm:$0xff]
      %v177 = vld [vmem:[%s165 + $0x49] sm:$0xff]
      %v178 = vld [vmem:[%s165 + $0x51] sm:$0xff]
      %v179 = vld [vmem:[%s165 + $0x61] sm:$0xff]
      %v180 = vld [vmem:[%s165 + $0x69] sm:$0xff]
      %v181 = vld [vmem:[%s165 + $0x79] sm:$0xff]
      %v182 = vld [vmem:[%s165 + $0x81] sm:$0xff]
      %v183 = vld [vmem:[%s165 + $0x91] sm:$0xff]
      %v184 = vld [vmem:[%s165 + $0x99] sm:$0xff]
      %v185 = vld [vmem:[%s165 + $0xa9] sm:$0xff]
      %v186 = vld [vmem:[%s165 + $0xb1] sm:$0xff]
      %v187 = vld [vmem:[%s165 + $0xc1] sm:$0xff]
      %v188 = vld [vmem:[%s165 + $0xc9] sm:$0xff]
      %v189 = vld [vmem:[%s165 + $0xd9] sm:$0xff]
      %v190 = vld [vmem:[%s165 + $0xe1] sm:$0xff]
      %v191 = vld [vmem:[%s165 + $0xf1] sm:$0xff]
      %v192 = vld [vmem:[%s165 + $0xf9] sm:$0xff]
      %v193 = vld [vmem:[%s165 + $0x109] sm:$0xff]
      %v194 = vld [vmem:[%s165 + $0x111] sm:$0xff]
      %v195 = vld [vmem:[%s165 + $0x121] sm:$0xff]
      %v196 = vld [vmem:[%s165 + $0x129] sm:$0xff]
      %v197 = vld [vmem:[%s165 + $0x139] sm:$0xff]
      %v198 = vld [vmem:[%s165 + $0x141] sm:$0xff]
      %v199 = vld [vmem:[%s165 + $0x151] sm:$0xff]
      %v200 = vld [vmem:[%s165 + $0x159] sm:$0xff]
      %v201 = vld [vmem:[%s165 + $0x169] sm:$0xff]
      %v202 = vld [vmem:[%s165 + $0x171] sm:$0xff]
      %v203 = vld [vmem:[%s165 + $0x181] sm:$0xff]
      %v204 = vld [vmem:[%s165 + $0x189] sm:$0xff]
      %v205 = vld [vmem:[%s165 + $0x199] sm:$0xff]
      %v206 = vld [vmem:[%s165 + $0x1a1] sm:$0xff]
      %s207 = scalar_lea.vmem %s165, 24
      %v208 = vld [vmem:[%s207] sm:$0xff]
      %v209 = vld [vmem:[%s207 + $0x8] sm:$0xff]
      %v210 = vld [vmem:[%s207 + $0x10] sm:$0x3]
      %v211 = vld [vmem:[%s207 + $0x18] sm:$0xff]
      %v212 = vld [vmem:[%s207 + $0x20] sm:$0xff]
      %v213 = vld [vmem:[%s207 + $0x28] sm:$0x3]
      %v214 = vld [vmem:[%s207 + $0x30] sm:$0xff]
      %v215 = vld [vmem:[%s207 + $0x38] sm:$0xff]
      %v216 = vld [vmem:[%s207 + $0x40] sm:$0x3]
      %v217 = vld [vmem:[%s207 + $0x48] sm:$0xff]
      %v218 = vld [vmem:[%s207 + $0x50] sm:$0xff]
      %v219 = vld [vmem:[%s207 + $0x58] sm:$0x3]
      %v220 = vld [vmem:[%s207 + $0x60] sm:$0xff]
      %v221 = vld [vmem:[%s207 + $0x68] sm:$0xff]
      %v222 = vld [vmem:[%s207 + $0x70] sm:$0x3]
      %v223 = vld [vmem:[%s207 + $0x78] sm:$0xff]
      %v224 = vld [vmem:[%s207 + $0x80] sm:$0xff]
      %v225 = vld [vmem:[%s207 + $0x88] sm:$0x3]
      %v226 = vld [vmem:[%s207 + $0x90] sm:$0xff]
      %v227 = vld [vmem:[%s207 + $0x98] sm:$0xff]
      %v228 = vld [vmem:[%s207 + $0xa0] sm:$0x3]
      %v229 = vld [vmem:[%s207 + $0xa8] sm:$0xff]
      %v230 = vld [vmem:[%s207 + $0xb0] sm:$0xff]
      %v231 = vld [vmem:[%s207 + $0xb8] sm:$0x3]
      %v232 = vld [vmem:[%s207 + $0xc0] sm:$0xff]
      %v233 = vld [vmem:[%s207 + $0xc8] sm:$0xff]
      %v234 = vld [vmem:[%s207 + $0xd0] sm:$0x3]
      %v235 = vld [vmem:[%s207 + $0xd8] sm:$0xff]
      %v236 = vld [vmem:[%s207 + $0xe0] sm:$0xff]
      %v237 = vld [vmem:[%s207 + $0xe8] sm:$0x3]
      %v238 = vld [vmem:[%s207 + $0xf0] sm:$0xff]
      %v239 = vld [vmem:[%s207 + $0xf8] sm:$0xff]
      %v240 = vld [vmem:[%s207 + $0x100] sm:$0x3]
      %v241 = vld [vmem:[%s207 + $0x108] sm:$0xff]
      %v242 = vld [vmem:[%s207 + $0x110] sm:$0xff]
      %v243 = vld [vmem:[%s207 + $0x118] sm:$0x3]
      %v244 = vld [vmem:[%s207 + $0x120] sm:$0xff]
      %v245 = vld [vmem:[%s207 + $0x128] sm:$0xff]
      %v246 = vld [vmem:[%s207 + $0x130] sm:$0x3]
      %v247 = vld [vmem:[%s207 + $0x138] sm:$0xff]
      %v248 = vld [vmem:[%s207 + $0x140] sm:$0xff]
      %v249 = vld [vmem:[%s207 + $0x148] sm:$0x3]
      %v250 = vld [vmem:[%s207 + $0x150] sm:$0xff]
      %v251 = vld [vmem:[%s207 + $0x158] sm:$0xff]
      %v252 = vld [vmem:[%s207 + $0x160] sm:$0x3]
      %v253 = vld [vmem:[%s207 + $0x168] sm:$0xff]
      %v254 = vld [vmem:[%s207 + $0x170] sm:$0xff]
      %v255 = vld [vmem:[%s207 + $0x178] sm:$0x3]
      %v256 = vld [vmem:[%s2] sm:$0x1]
      %v258 = vlaneseq
      %v259 = vshrl.u32 %v258, 7
      %v260 = vsub.s32 0, %v259
      %v261 = vrot.slane %v256, %v260
      %v263 = vld [vmem:[%s1] sm:$0xf]
      %vm264 = vcmask 31744
      %v266 = vsel %vm264, %v171, 0
      %v269 = vsel %vm264, %v172, 0
      %v272 = vsel %vm264, %v173, 0
      %v275 = vsel %vm264, %v174, 0
      %v278 = vsel %vm264, %v175, 0
      %v281 = vsel %vm264, %v176, 0
      %v284 = vsel %vm264, %v177, 0
      %v287 = vsel %vm264, %v178, 0
      %v290 = vsel %vm264, %v179, 0
      %v293 = vsel %vm264, %v180, 0
      %v296 = vsel %vm264, %v181, 0
      %v299 = vsel %vm264, %v182, 0
      %v302 = vsel %vm264, %v183, 0
      %v305 = vsel %vm264, %v184, 0
      %v308 = vsel %vm264, %v185, 0
      %v311 = vsel %vm264, %v186, 0
      %v314 = vsel %vm264, %v187, 0
      %v317 = vsel %vm264, %v188, 0
      %v320 = vsel %vm264, %v189, 0
      %v323 = vsel %vm264, %v190, 0
      %v326 = vsel %vm264, %v191, 0
      %v329 = vsel %vm264, %v192, 0
      %v332 = vsel %vm264, %v193, 0
      %v335 = vsel %vm264, %v194, 0
      %v338 = vsel %vm264, %v195, 0
      %v341 = vsel %vm264, %v196, 0
      %v344 = vsel %vm264, %v197, 0
      %v347 = vsel %vm264, %v198, 0
      %v350 = vsel %vm264, %v199, 0
      %v353 = vsel %vm264, %v200, 0
      %v356 = vsel %vm264, %v201, 0
      %v359 = vsel %vm264, %v202, 0
      %vm361 = vcmask 1043456
      %v363 = vsel %vm361, %v263, 0
      %365 = vmatprep.subr.mxu0 0.0
      %366 = vmatpush1.msra.mxu0 0.0
      %367 = vmatprep.subr.mxu0 0.0
      %368 = vmatpush1.msra.mxu0 0.0
      %369 = vmatprep.subr.mxu0 0.0
      %370 = vmatpush1.msra.mxu0 0.0
      %371 = vmatprep.subr.mxu0 0.0
      %372 = vmatpush1.msra.mxu0 0.0
      %373 = vmatprep.subr.mxu0 0.0
      %374 = vmatpush1.msra.mxu0 0.0
      %375 = vmatprep.subr.mxu0 0.0
      %376 = vmatpush1.msra.mxu0 0.0
      %377 = vmatprep.subr.mxu0 0.0
      %378 = vmatpush1.msra.mxu0 0.0
      %379 = vmatprep.subr.mxu0 0.0
      %380 = vmatpush1.msra.mxu0 0.0
      %381 = vmatprep.subr.mxu0 0.0
      %382 = vmatpush1.msra.mxu0 0.0
      %383 = vmatprep.subr.mxu0 0.0
      %384 = vmatpush1.msra.mxu0 0.0
      %385 = vmatprep.subr.mxu0 0.0
      %386 = vmatpush1.msra.mxu0 0.0
      %387 = vmatprep.subr.mxu0 0.0
      %388 = vmatpush1.msra.mxu0 0.0
      %389 = vmatprep.subr.mxu0 0.0
      %390 = vmatpush1.msra.mxu0 0.0
      %391 = vmatprep.subr.mxu0 0.0
      %392 = vmatpush1.msra.mxu0 0.0
      %393 = vmatprep.subr.mxu0 0.0
      %394 = vmatpush1.msra.mxu0 0.0
      %395 = vmatprep.subr.mxu0 0.0
      %396 = vmatpush1.msra.mxu0 %v363
      %397 = vmatprep.subr.mxu0 0.0
      %398 = vmatpush2.msra.mxu0 0.0
      %399 = vmatprep.subr.mxu0 0.0
      %400 = vmatpush2.msra.mxu0 0.0
      %401 = vmatprep.subr.mxu0 0.0
      %402 = vmatpush2.msra.mxu0 0.0
      %403 = vmatprep.subr.mxu0 0.0
      %404 = vmatpush2.msra.mxu0 0.0
      %405 = vmatprep.subr.mxu0 0.0
      %406 = vmatpush2.msra.mxu0 0.0
      %407 = vmatprep.subr.mxu0 0.0
      %408 = vmatpush2.msra.mxu0 0.0
      %409 = vmatprep.subr.mxu0 0.0
      %410 = vmatpush2.msra.mxu0 0.0
      %411 = vmatprep.subr.mxu0 0.0
      %412 = vmatpush2.msra.mxu0 0.0
      %413 = vmatprep.subr.mxu0 0.0
      %414 = vmatpush2.msra.mxu0 0.0
      %415 = vmatprep.subr.mxu0 0.0
      %416 = vmatpush2.msra.mxu0 0.0
      %417 = vmatprep.subr.mxu0 0.0
      %418 = vmatpush2.msra.mxu0 0.0
      %419 = vmatprep.subr.mxu0 0.0
      %420 = vmatpush2.msra.mxu0 0.0
      %421 = vmatprep.subr.mxu0 0.0
      %422 = vmatpush2.msra.mxu0 0.0
      %423 = vmatprep.subr.mxu0 0.0
      %424 = vmatpush2.msra.mxu0 0.0
      %425 = vmatprep.subr.mxu0 0.0
      %426 = vmatpush2.msra.mxu0 0.0
      %427 = vmatprep.subr.mxu0 0.0
      %428 = vmatpush2.msra.mxu0 0.0
      %429 = vmatprep.mubr.f32.mxu0 0.0
      %430 = vmatmul.mubr.f32.gmra.mxu0 %v266
      %v431 = vpop.f32.mrf.mxu0
      %v432 = vadd.f32 0.0, %v431
      %v433 = vpop.f32.mrf.mxu0
      %434 = vmatprep.mubr.f32.mxu0 0.0
      %435 = vmatmul.mubr.f32.gmra.mxu0 %v269
      %v436 = vpop.f32.mrf.mxu0
      %v437 = vadd.f32 0.0, %v436
      %v438 = vpop.f32.mrf.mxu0
      %439 = vmatprep.mubr.f32.mxu0 0.0
      %440 = vmatmul.mubr.f32.gmra.mxu0 %v272
      %v441 = vpop.f32.mrf.mxu0
      %v442 = vadd.f32 0.0, %v441
      %v443 = vpop.f32.mrf.mxu0
      %444 = vmatprep.mubr.f32.mxu0 0.0
      %445 = vmatmul.mubr.f32.gmra.mxu0 %v275
      %v446 = vpop.f32.mrf.mxu0
      %v447 = vadd.f32 0.0, %v446
      %v448 = vpop.f32.mrf.mxu0
      %449 = vmatprep.mubr.f32.mxu0 0.0
      %450 = vmatmul.mubr.f32.gmra.mxu0 %v278
      %v451 = vpop.f32.mrf.mxu0
      %v452 = vadd.f32 0.0, %v451
      %v453 = vpop.f32.mrf.mxu0
      %454 = vmatprep.mubr.f32.mxu0 0.0
      %455 = vmatmul.mubr.f32.gmra.mxu0 %v281
      %v456 = vpop.f32.mrf.mxu0
      %v457 = vadd.f32 0.0, %v456
      %v458 = vpop.f32.mrf.mxu0
      %459 = vmatprep.mubr.f32.mxu0 0.0
      %460 = vmatmul.mubr.f32.gmra.mxu0 %v284
      %v461 = vpop.f32.mrf.mxu0
      %v462 = vadd.f32 0.0, %v461
      %v463 = vpop.f32.mrf.mxu0
      %464 = vmatprep.mubr.f32.mxu0 0.0
      %465 = vmatmul.mubr.f32.gmra.mxu0 %v287
      %v466 = vpop.f32.mrf.mxu0
      %v467 = vadd.f32 0.0, %v466
      %v468 = vpop.f32.mrf.mxu0
      %469 = vmatprep.mubr.f32.mxu0 0.0
      %470 = vmatmul.mubr.f32.gmra.mxu0 %v290
      %v471 = vpop.f32.mrf.mxu0
      %v472 = vadd.f32 0.0, %v471
      %v473 = vpop.f32.mrf.mxu0
      %474 = vmatprep.mubr.f32.mxu0 0.0
      %475 = vmatmul.mubr.f32.gmra.mxu0 %v293
      %v476 = vpop.f32.mrf.mxu0
      %v477 = vadd.f32 0.0, %v476
      %v478 = vpop.f32.mrf.mxu0
      %479 = vmatprep.mubr.f32.mxu0 0.0
      %480 = vmatmul.mubr.f32.gmra.mxu0 %v296
      %v481 = vpop.f32.mrf.mxu0
      %v482 = vadd.f32 0.0, %v481
      %v483 = vpop.f32.mrf.mxu0
      %484 = vmatprep.mubr.f32.mxu0 0.0
      %485 = vmatmul.mubr.f32.gmra.mxu0 %v299
      %v486 = vpop.f32.mrf.mxu0
      %v487 = vadd.f32 0.0, %v486
      %v488 = vpop.f32.mrf.mxu0
      %489 = vmatprep.mubr.f32.mxu0 0.0
      %490 = vmatmul.mubr.f32.gmra.mxu0 %v302
      %v491 = vpop.f32.mrf.mxu0
      %v492 = vadd.f32 0.0, %v491
      %v493 = vpop.f32.mrf.mxu0
      %494 = vmatprep.mubr.f32.mxu0 0.0
      %495 = vmatmul.mubr.f32.gmra.mxu0 %v305
      %v496 = vpop.f32.mrf.mxu0
      %v497 = vadd.f32 0.0, %v496
      %v498 = vpop.f32.mrf.mxu0
      %499 = vmatprep.mubr.f32.mxu0 0.0
      %500 = vmatmul.mubr.f32.gmra.mxu0 %v308
      %v501 = vpop.f32.mrf.mxu0
      %v502 = vadd.f32 0.0, %v501
      %v503 = vpop.f32.mrf.mxu0
      %504 = vmatprep.mubr.f32.mxu0 0.0
      %505 = vmatmul.mubr.f32.gmra.mxu0 %v311
      %v506 = vpop.f32.mrf.mxu0
      %v507 = vadd.f32 0.0, %v506
      %v508 = vpop.f32.mrf.mxu0
      %509 = vmatprep.mubr.f32.mxu0 0.0
      %510 = vmatmul.mubr.f32.gmra.mxu0 %v314
      %v511 = vpop.f32.mrf.mxu0
      %v512 = vadd.f32 0.0, %v511
      %v513 = vpop.f32.mrf.mxu0
      %514 = vmatprep.mubr.f32.mxu0 0.0
      %515 = vmatmul.mubr.f32.gmra.mxu0 %v317
      %v516 = vpop.f32.mrf.mxu0
      %v517 = vadd.f32 0.0, %v516
      %v518 = vpop.f32.mrf.mxu0
      %519 = vmatprep.mubr.f32.mxu0 0.0
      %520 = vmatmul.mubr.f32.gmra.mxu0 %v320
      %v521 = vpop.f32.mrf.mxu0
      %v522 = vadd.f32 0.0, %v521
      %v523 = vpop.f32.mrf.mxu0
      %524 = vmatprep.mubr.f32.mxu0 0.0
      %525 = vmatmul.mubr.f32.gmra.mxu0 %v323
      %v526 = vpop.f32.mrf.mxu0
      %v527 = vadd.f32 0.0, %v526
      %v528 = vpop.f32.mrf.mxu0
      %529 = vmatprep.mubr.f32.mxu0 0.0
      %530 = vmatmul.mubr.f32.gmra.mxu0 %v326
      %v531 = vpop.f32.mrf.mxu0
      %v532 = vadd.f32 0.0, %v531
      %v533 = vpop.f32.mrf.mxu0
      %534 = vmatprep.mubr.f32.mxu0 0.0
      %535 = vmatmul.mubr.f32.gmra.mxu0 %v329
      %v536 = vpop.f32.mrf.mxu0
      %v537 = vadd.f32 0.0, %v536
      %v538 = vpop.f32.mrf.mxu0
      %539 = vmatprep.mubr.f32.mxu0 0.0
      %540 = vmatmul.mubr.f32.gmra.mxu0 %v332
      %v541 = vpop.f32.mrf.mxu0
      %v542 = vadd.f32 0.0, %v541
      %v543 = vpop.f32.mrf.mxu0
      %544 = vmatprep.mubr.f32.mxu0 0.0
      %545 = vmatmul.mubr.f32.gmra.mxu0 %v335
      %v546 = vpop.f32.mrf.mxu0
      %v547 = vadd.f32 0.0, %v546
      %v548 = vpop.f32.mrf.mxu0
      %549 = vmatprep.mubr.f32.mxu0 0.0
      %550 = vmatmul.mubr.f32.gmra.mxu0 %v338
      %v551 = vpop.f32.mrf.mxu0
      %v552 = vadd.f32 0.0, %v551
      %v553 = vpop.f32.mrf.mxu0
      %554 = vmatprep.mubr.f32.mxu0 0.0
      %555 = vmatmul.mubr.f32.gmra.mxu0 %v341
      %v556 = vpop.f32.mrf.mxu0
      %v557 = vadd.f32 0.0, %v556
      %v558 = vpop.f32.mrf.mxu0
      %559 = vmatprep.mubr.f32.mxu0 0.0
      %560 = vmatmul.mubr.f32.gmra.mxu0 %v344
      %v561 = vpop.f32.mrf.mxu0
      %v562 = vadd.f32 0.0, %v561
      %v563 = vpop.f32.mrf.mxu0
      %564 = vmatprep.mubr.f32.mxu0 0.0
      %565 = vmatmul.mubr.f32.gmra.mxu0 %v347
      %v566 = vpop.f32.mrf.mxu0
      %v567 = vadd.f32 0.0, %v566
      %v568 = vpop.f32.mrf.mxu0
      %569 = vmatprep.mubr.f32.mxu0 0.0
      %570 = vmatmul.mubr.f32.gmra.mxu0 %v350
      %v571 = vpop.f32.mrf.mxu0
      %v572 = vadd.f32 0.0, %v571
      %v573 = vpop.f32.mrf.mxu0
      %574 = vmatprep.mubr.f32.mxu0 0.0
      %575 = vmatmul.mubr.f32.gmra.mxu0 %v353
      %v576 = vpop.f32.mrf.mxu0
      %v577 = vadd.f32 0.0, %v576
      %v578 = vpop.f32.mrf.mxu0
      %579 = vmatprep.mubr.f32.mxu0 0.0
      %580 = vmatmul.mubr.f32.gmra.mxu0 %v356
      %v581 = vpop.f32.mrf.mxu0
      %v582 = vadd.f32 0.0, %v581
      %v583 = vpop.f32.mrf.mxu0
      %584 = vmatprep.mubr.f32.mxu0 0.0
      %585 = vmatmul.mubr.f32.gmra.mxu0 %v359
      %v586 = vpop.f32.mrf.mxu0
      %v587 = vadd.f32 0.0, %v586
      %v588 = vpop.f32.mrf.mxu0
      %589 = vdwg.mxu0
      %v590 = vadd.f32 %v261, %v432
      %v591 = vadd.f32 %v261, %v437
      %v592 = vadd.f32 %v261, %v442
      %v593 = vadd.f32 %v261, %v447
      %v594 = vadd.f32 %v261, %v452
      %v595 = vadd.f32 %v261, %v457
      %v596 = vadd.f32 %v261, %v462
      %v597 = vadd.f32 %v261, %v467
      %v598 = vadd.f32 %v261, %v472
      %v599 = vadd.f32 %v261, %v477
      %v600 = vadd.f32 %v261, %v482
      %v601 = vadd.f32 %v261, %v487
      %v602 = vadd.f32 %v261, %v492
      %v603 = vadd.f32 %v261, %v497
      %v604 = vadd.f32 %v261, %v502
      %v605 = vadd.f32 %v261, %v507
      %v606 = vadd.f32 %v261, %v512
      %v607 = vadd.f32 %v261, %v517
      %v608 = vadd.f32 %v261, %v522
      %v609 = vadd.f32 %v261, %v527
      %v610 = vadd.f32 %v261, %v532
      %v611 = vadd.f32 %v261, %v537
      %v612 = vadd.f32 %v261, %v542
      %v613 = vadd.f32 %v261, %v547
      %v614 = vadd.f32 %v261, %v552
      %v615 = vadd.f32 %v261, %v557
      %v616 = vadd.f32 %v261, %v562
      %v617 = vadd.f32 %v261, %v567
      %v618 = vadd.f32 %v261, %v572
      %v619 = vadd.f32 %v261, %v577
      %v620 = vadd.f32 %v261, %v582
      %v621 = vadd.f32 %v261, %v587
      %s622 = scalar_lea.vmem %s1, 4
      %v623 = vld [vmem:[%s622] sm:$0xf]
      %v625 = vsel %vm264, %v203, 0
      %v628 = vsel %vm264, %v204, 0
      %v631 = vsel %vm361, %v623, 0
      %633 = vmatprep.subr.mxu0 0.0
      %634 = vmatpush1.msra.mxu0 0.0
      %635 = vmatprep.subr.mxu0 0.0
      %636 = vmatpush1.msra.mxu0 0.0
      %637 = vmatprep.subr.mxu0 0.0
      %638 = vmatpush1.msra.mxu0 0.0
      %639 = vmatprep.subr.mxu0 0.0
      %640 = vmatpush1.msra.mxu0 0.0
      %641 = vmatprep.subr.mxu0 0.0
      %642 = vmatpush1.msra.mxu0 0.0
      %643 = vmatprep.subr.mxu0 0.0
      %644 = vmatpush1.msra.mxu0 0.0
      %645 = vmatprep.subr.mxu0 0.0
      %646 = vmatpush1.msra.mxu0 0.0
      %647 = vmatprep.subr.mxu0 0.0
      %648 = vmatpush1.msra.mxu0 0.0
      %649 = vmatprep.subr.mxu0 0.0
      %650 = vmatpush1.msra.mxu0 0.0
      %651 = vmatprep.subr.mxu0 0.0
      %652 = vmatpush1.msra.mxu0 0.0
      %653 = vmatprep.subr.mxu0 0.0
      %654 = vmatpush1.msra.mxu0 0.0
      %655 = vmatprep.subr.mxu0 0.0
      %656 = vmatpush1.msra.mxu0 0.0
      %657 = vmatprep.subr.mxu0 0.0
      %658 = vmatpush1.msra.mxu0 0.0
      %659 = vmatprep.subr.mxu0 0.0
      %660 = vmatpush1.msra.mxu0 0.0
      %661 = vmatprep.subr.mxu0 0.0
      %662 = vmatpush1.msra.mxu0 0.0
      %663 = vmatprep.subr.mxu0 0.0
      %664 = vmatpush1.msra.mxu0 %v631
      %665 = vmatprep.subr.mxu0 0.0
      %666 = vmatpush2.msra.mxu0 0.0
      %667 = vmatprep.subr.mxu0 0.0
      %668 = vmatpush2.msra.mxu0 0.0
      %669 = vmatprep.subr.mxu0 0.0
      %670 = vmatpush2.msra.mxu0 0.0
      %671 = vmatprep.subr.mxu0 0.0
      %672 = vmatpush2.msra.mxu0 0.0
      %673 = vmatprep.subr.mxu0 0.0
      %674 = vmatpush2.msra.mxu0 0.0
      %675 = vmatprep.subr.mxu0 0.0
      %676 = vmatpush2.msra.mxu0 0.0
      %677 = vmatprep.subr.mxu0 0.0
      %678 = vmatpush2.msra.mxu0 0.0
      %679 = vmatprep.subr.mxu0 0.0
      %680 = vmatpush2.msra.mxu0 0.0
      %681 = vmatprep.subr.mxu0 0.0
      %682 = vmatpush2.msra.mxu0 0.0
      %683 = vmatprep.subr.mxu0 0.0
      %684 = vmatpush2.msra.mxu0 0.0
      %685 = vmatprep.subr.mxu0 0.0
      %686 = vmatpush2.msra.mxu0 0.0
      %687 = vmatprep.subr.mxu0 0.0
      %688 = vmatpush2.msra.mxu0 0.0
      %689 = vmatprep.subr.mxu0 0.0
      %690 = vmatpush2.msra.mxu0 0.0
      %691 = vmatprep.subr.mxu0 0.0
      %692 = vmatpush2.msra.mxu0 0.0
      %693 = vmatprep.subr.mxu0 0.0
      %694 = vmatpush2.msra.mxu0 0.0
      %695 = vmatprep.subr.mxu0 0.0
      %696 = vmatpush2.msra.mxu0 0.0
      %697 = vmatprep.mubr.f32.mxu0 0.0
      %698 = vmatmul.mubr.f32.gmra.mxu0 %v272
      %v699 = vpop.f32.mrf.mxu0
      %v700 = vadd.f32 0.0, %v699
      %v701 = vpop.f32.mrf.mxu0
      %702 = vmatprep.mubr.f32.mxu0 0.0
      %703 = vmatmul.mubr.f32.gmra.mxu0 %v275
      %v704 = vpop.f32.mrf.mxu0
      %v705 = vadd.f32 0.0, %v704
      %v706 = vpop.f32.mrf.mxu0
      %707 = vmatprep.mubr.f32.mxu0 0.0
      %708 = vmatmul.mubr.f32.gmra.mxu0 %v278
      %v709 = vpop.f32.mrf.mxu0
      %v710 = vadd.f32 0.0, %v709
      %v711 = vpop.f32.mrf.mxu0
      %712 = vmatprep.mubr.f32.mxu0 0.0
      %713 = vmatmul.mubr.f32.gmra.mxu0 %v281
      %v714 = vpop.f32.mrf.mxu0
      %v715 = vadd.f32 0.0, %v714
      %v716 = vpop.f32.mrf.mxu0
      %717 = vmatprep.mubr.f32.mxu0 0.0
      %718 = vmatmul.mubr.f32.gmra.mxu0 %v284
      %v719 = vpop.f32.mrf.mxu0
      %v720 = vadd.f32 0.0, %v719
      %v721 = vpop.f32.mrf.mxu0
      %722 = vmatprep.mubr.f32.mxu0 0.0
      %723 = vmatmul.mubr.f32.gmra.mxu0 %v287
      %v724 = vpop.f32.mrf.mxu0
      %v725 = vadd.f32 0.0, %v724
      %v726 = vpop.f32.mrf.mxu0
      %727 = vmatprep.mubr.f32.mxu0 0.0
      %728 = vmatmul.mubr.f32.gmra.mxu0 %v290
      %v729 = vpop.f32.mrf.mxu0
      %v730 = vadd.f32 0.0, %v729
      %v731 = vpop.f32.mrf.mxu0
      %732 = vmatprep.mubr.f32.mxu0 0.0
      %733 = vmatmul.mubr.f32.gmra.mxu0 %v293
      %v734 = vpop.f32.mrf.mxu0
      %v735 = vadd.f32 0.0, %v734
      %v736 = vpop.f32.mrf.mxu0
      %737 = vmatprep.mubr.f32.mxu0 0.0
      %738 = vmatmul.mubr.f32.gmra.mxu0 %v296
      %v739 = vpop.f32.mrf.mxu0
      %v740 = vadd.f32 0.0, %v739
      %v741 = vpop.f32.mrf.mxu0
      %742 = vmatprep.mubr.f32.mxu0 0.0
      %743 = vmatmul.mubr.f32.gmra.mxu0 %v299
      %v744 = vpop.f32.mrf.mxu0
      %v745 = vadd.f32 0.0, %v744
      %v746 = vpop.f32.mrf.mxu0
      %747 = vmatprep.mubr.f32.mxu0 0.0
      %748 = vmatmul.mubr.f32.gmra.mxu0 %v302
      %v749 = vpop.f32.mrf.mxu0
      %v750 = vadd.f32 0.0, %v749
      %v751 = vpop.f32.mrf.mxu0
      %752 = vmatprep.mubr.f32.mxu0 0.0
      %753 = vmatmul.mubr.f32.gmra.mxu0 %v305
      %v754 = vpop.f32.mrf.mxu0
      %v755 = vadd.f32 0.0, %v754
      %v756 = vpop.f32.mrf.mxu0
      %757 = vmatprep.mubr.f32.mxu0 0.0
      %758 = vmatmul.mubr.f32.gmra.mxu0 %v308
      %v759 = vpop.f32.mrf.mxu0
      %v760 = vadd.f32 0.0, %v759
      %v761 = vpop.f32.mrf.mxu0
      %762 = vmatprep.mubr.f32.mxu0 0.0
      %763 = vmatmul.mubr.f32.gmra.mxu0 %v311
      %v764 = vpop.f32.mrf.mxu0
      %v765 = vadd.f32 0.0, %v764
      %v766 = vpop.f32.mrf.mxu0
      %767 = vmatprep.mubr.f32.mxu0 0.0
      %768 = vmatmul.mubr.f32.gmra.mxu0 %v314
      %v769 = vpop.f32.mrf.mxu0
      %v770 = vadd.f32 0.0, %v769
      %v771 = vpop.f32.mrf.mxu0
      %772 = vmatprep.mubr.f32.mxu0 0.0
      %773 = vmatmul.mubr.f32.gmra.mxu0 %v317
      %v774 = vpop.f32.mrf.mxu0
      %v775 = vadd.f32 0.0, %v774
      %v776 = vpop.f32.mrf.mxu0
      %777 = vmatprep.mubr.f32.mxu0 0.0
      %778 = vmatmul.mubr.f32.gmra.mxu0 %v320
      %v779 = vpop.f32.mrf.mxu0
      %v780 = vadd.f32 0.0, %v779
      %v781 = vpop.f32.mrf.mxu0
      %782 = vmatprep.mubr.f32.mxu0 0.0
      %783 = vmatmul.mubr.f32.gmra.mxu0 %v323
      %v784 = vpop.f32.mrf.mxu0
      %v785 = vadd.f32 0.0, %v784
      %v786 = vpop.f32.mrf.mxu0
      %787 = vmatprep.mubr.f32.mxu0 0.0
      %788 = vmatmul.mubr.f32.gmra.mxu0 %v326
      %v789 = vpop.f32.mrf.mxu0
      %v790 = vadd.f32 0.0, %v789
      %v791 = vpop.f32.mrf.mxu0
      %792 = vmatprep.mubr.f32.mxu0 0.0
      %793 = vmatmul.mubr.f32.gmra.mxu0 %v329
      %v794 = vpop.f32.mrf.mxu0
      %v795 = vadd.f32 0.0, %v794
      %v796 = vpop.f32.mrf.mxu0
      %797 = vmatprep.mubr.f32.mxu0 0.0
      %798 = vmatmul.mubr.f32.gmra.mxu0 %v332
      %v799 = vpop.f32.mrf.mxu0
      %v800 = vadd.f32 0.0, %v799
      %v801 = vpop.f32.mrf.mxu0
      %802 = vmatprep.mubr.f32.mxu0 0.0
      %803 = vmatmul.mubr.f32.gmra.mxu0 %v335
      %v804 = vpop.f32.mrf.mxu0
      %v805 = vadd.f32 0.0, %v804
      %v806 = vpop.f32.mrf.mxu0
      %807 = vmatprep.mubr.f32.mxu0 0.0
      %808 = vmatmul.mubr.f32.gmra.mxu0 %v338
      %v809 = vpop.f32.mrf.mxu0
      %v810 = vadd.f32 0.0, %v809
      %v811 = vpop.f32.mrf.mxu0
      %812 = vmatprep.mubr.f32.mxu0 0.0
      %813 = vmatmul.mubr.f32.gmra.mxu0 %v341
      %v814 = vpop.f32.mrf.mxu0
      %v815 = vadd.f32 0.0, %v814
      %v816 = vpop.f32.mrf.mxu0
      %817 = vmatprep.mubr.f32.mxu0 0.0
      %818 = vmatmul.mubr.f32.gmra.mxu0 %v344
      %v819 = vpop.f32.mrf.mxu0
      %v820 = vadd.f32 0.0, %v819
      %v821 = vpop.f32.mrf.mxu0
      %822 = vmatprep.mubr.f32.mxu0 0.0
      %823 = vmatmul.mubr.f32.gmra.mxu0 %v347
      %v824 = vpop.f32.mrf.mxu0
      %v825 = vadd.f32 0.0, %v824
      %v826 = vpop.f32.mrf.mxu0
      %827 = vmatprep.mubr.f32.mxu0 0.0
      %828 = vmatmul.mubr.f32.gmra.mxu0 %v350
      %v829 = vpop.f32.mrf.mxu0
      %v830 = vadd.f32 0.0, %v829
      %v831 = vpop.f32.mrf.mxu0
      %832 = vmatprep.mubr.f32.mxu0 0.0
      %833 = vmatmul.mubr.f32.gmra.mxu0 %v353
      %v834 = vpop.f32.mrf.mxu0
      %v835 = vadd.f32 0.0, %v834
      %v836 = vpop.f32.mrf.mxu0
      %837 = vmatprep.mubr.f32.mxu0 0.0
      %838 = vmatmul.mubr.f32.gmra.mxu0 %v356
      %v839 = vpop.f32.mrf.mxu0
      %v840 = vadd.f32 0.0, %v839
      %v841 = vpop.f32.mrf.mxu0
      %842 = vmatprep.mubr.f32.mxu0 0.0
      %843 = vmatmul.mubr.f32.gmra.mxu0 %v359
      %v844 = vpop.f32.mrf.mxu0
      %v845 = vadd.f32 0.0, %v844
      %v846 = vpop.f32.mrf.mxu0
      %847 = vmatprep.mubr.f32.mxu0 0.0
      %848 = vmatmul.mubr.f32.gmra.mxu0 %v625
      %v849 = vpop.f32.mrf.mxu0
      %v850 = vadd.f32 0.0, %v849
      %v851 = vpop.f32.mrf.mxu0
      %852 = vmatprep.mubr.f32.mxu0 0.0
      %853 = vmatmul.mubr.f32.gmra.mxu0 %v628
      %v854 = vpop.f32.mrf.mxu0
      %v855 = vadd.f32 0.0, %v854
      %v856 = vpop.f32.mrf.mxu0
      %857 = vdwg.mxu0
      %v858 = vadd.f32 %v590, %v700
      %v859 = vadd.f32 %v591, %v705
      %v860 = vadd.f32 %v592, %v710
      %v861 = vadd.f32 %v593, %v715
      %v862 = vadd.f32 %v594, %v720
      %v863 = vadd.f32 %v595, %v725
      %v864 = vadd.f32 %v596, %v730
      %v865 = vadd.f32 %v597, %v735
      %v866 = vadd.f32 %v598, %v740
      %v867 = vadd.f32 %v599, %v745
      %v868 = vadd.f32 %v600, %v750
      %v869 = vadd.f32 %v601, %v755
      %v870 = vadd.f32 %v602, %v760
      %v871 = vadd.f32 %v603, %v765
      %v872 = vadd.f32 %v604, %v770
      %v873 = vadd.f32 %v605, %v775
      %v874 = vadd.f32 %v606, %v780
      %v875 = vadd.f32 %v607, %v785
      %v876 = vadd.f32 %v608, %v790
      %v877 = vadd.f32 %v609, %v795
      %v878 = vadd.f32 %v610, %v800
      %v879 = vadd.f32 %v611, %v805
      %v880 = vadd.f32 %v612, %v810
      %v881 = vadd.f32 %v613, %v815
      %v882 = vadd.f32 %v614, %v820
      %v883 = vadd.f32 %v615, %v825
      %v884 = vadd.f32 %v616, %v830
      %v885 = vadd.f32 %v617, %v835
      %v886 = vadd.f32 %v618, %v840
      %v887 = vadd.f32 %v619, %v845
      %v888 = vadd.f32 %v620, %v850
      %v889 = vadd.f32 %v621, %v855
      %s890 = scalar_lea.vmem %s1, 8
      %v891 = vld [vmem:[%s890] sm:$0xf]
      %v893 = vsel %vm264, %v205, 0
      %v896 = vsel %vm264, %v206, 0
      %v899 = vsel %vm361, %v891, 0
      %901 = vmatprep.subr.mxu0 0.0
      %902 = vmatpush1.msra.mxu0 0.0
      %903 = vmatprep.subr.mxu0 0.0
      %904 = vmatpush1.msra.mxu0 0.0
      %905 = vmatprep.subr.mxu0 0.0
      %906 = vmatpush1.msra.mxu0 0.0
      %907 = vmatprep.subr.mxu0 0.0
      %908 = vmatpush1.msra.mxu0 0.0
      %909 = vmatprep.subr.mxu0 0.0
      %910 = vmatpush1.msra.mxu0 0.0
      %911 = vmatprep.subr.mxu0 0.0
      %912 = vmatpush1.msra.mxu0 0.0
      %913 = vmatprep.subr.mxu0 0.0
      %914 = vmatpush1.msra.mxu0 0.0
      %915 = vmatprep.subr.mxu0 0.0
      %916 = vmatpush1.msra.mxu0 0.0
      %917 = vmatprep.subr.mxu0 0.0
      %918 = vmatpush1.msra.mxu0 0.0
      %919 = vmatprep.subr.mxu0 0.0
      %920 = vmatpush1.msra.mxu0 0.0
      %921 = vmatprep.subr.mxu0 0.0
      %922 = vmatpush1.msra.mxu0 0.0
      %923 = vmatprep.subr.mxu0 0.0
      %924 = vmatpush1.msra.mxu0 0.0
      %925 = vmatprep.subr.mxu0 0.0
      %926 = vmatpush1.msra.mxu0 0.0
      %927 = vmatprep.subr.mxu0 0.0
      %928 = vmatpush1.msra.mxu0 0.0
      %929 = vmatprep.subr.mxu0 0.0
      %930 = vmatpush1.msra.mxu0 0.0
      %931 = vmatprep.subr.mxu0 0.0
      %932 = vmatpush1.msra.mxu0 %v899
      %933 = vmatprep.subr.mxu0 0.0
      %934 = vmatpush2.msra.mxu0 0.0
      %935 = vmatprep.subr.mxu0 0.0
      %936 = vmatpush2.msra.mxu0 0.0
      %937 = vmatprep.subr.mxu0 0.0
      %938 = vmatpush2.msra.mxu0 0.0
      %939 = vmatprep.subr.mxu0 0.0
      %940 = vmatpush2.msra.mxu0 0.0
      %941 = vmatprep.subr.mxu0 0.0
      %942 = vmatpush2.msra.mxu0 0.0
      %943 = vmatprep.subr.mxu0 0.0
      %944 = vmatpush2.msra.mxu0 0.0
      %945 = vmatprep.subr.mxu0 0.0
      %946 = vmatpush2.msra.mxu0 0.0
      %947 = vmatprep.subr.mxu0 0.0
      %948 = vmatpush2.msra.mxu0 0.0
      %949 = vmatprep.subr.mxu0 0.0
      %950 = vmatpush2.msra.mxu0 0.0
      %951 = vmatprep.subr.mxu0 0.0
      %952 = vmatpush2.msra.mxu0 0.0
      %953 = vmatprep.subr.mxu0 0.0
      %954 = vmatpush2.msra.mxu0 0.0
      %955 = vmatprep.subr.mxu0 0.0
      %956 = vmatpush2.msra.mxu0 0.0
      %957 = vmatprep.subr.mxu0 0.0
      %958 = vmatpush2.msra.mxu0 0.0
      %959 = vmatprep.subr.mxu0 0.0
      %960 = vmatpush2.msra.mxu0 0.0
      %961 = vmatprep.subr.mxu0 0.0
      %962 = vmatpush2.msra.mxu0 0.0
      %963 = vmatprep.subr.mxu0 0.0
      %964 = vmatpush2.msra.mxu0 0.0
      %965 = vmatprep.mubr.f32.mxu0 0.0
      %966 = vmatmul.mubr.f32.gmra.mxu0 %v278
      %v967 = vpop.f32.mrf.mxu0
      %v968 = vadd.f32 0.0, %v967
      %v969 = vpop.f32.mrf.mxu0
      %970 = vmatprep.mubr.f32.mxu0 0.0
      %971 = vmatmul.mubr.f32.gmra.mxu0 %v281
      %v972 = vpop.f32.mrf.mxu0
      %v973 = vadd.f32 0.0, %v972
      %v974 = vpop.f32.mrf.mxu0
      %975 = vmatprep.mubr.f32.mxu0 0.0
      %976 = vmatmul.mubr.f32.gmra.mxu0 %v284
      %v977 = vpop.f32.mrf.mxu0
      %v978 = vadd.f32 0.0, %v977
      %v979 = vpop.f32.mrf.mxu0
      %980 = vmatprep.mubr.f32.mxu0 0.0
      %981 = vmatmul.mubr.f32.gmra.mxu0 %v287
      %v982 = vpop.f32.mrf.mxu0
      %v983 = vadd.f32 0.0, %v982
      %v984 = vpop.f32.mrf.mxu0
      %985 = vmatprep.mubr.f32.mxu0 0.0
      %986 = vmatmul.mubr.f32.gmra.mxu0 %v290
      %v987 = vpop.f32.mrf.mxu0
      %v988 = vadd.f32 0.0, %v987
      %v989 = vpop.f32.mrf.mxu0
      %990 = vmatprep.mubr.f32.mxu0 0.0
      %991 = vmatmul.mubr.f32.gmra.mxu0 %v293
      %v992 = vpop.f32.mrf.mxu0
      %v993 = vadd.f32 0.0, %v992
      %v994 = vpop.f32.mrf.mxu0
      %995 = vmatprep.mubr.f32.mxu0 0.0
      %996 = vmatmul.mubr.f32.gmra.mxu0 %v296
      %v997 = vpop.f32.mrf.mxu0
      %v998 = vadd.f32 0.0, %v997
      %v999 = vpop.f32.mrf.mxu0
      %1000 = vmatprep.mubr.f32.mxu0 0.0
      %1001 = vmatmul.mubr.f32.gmra.mxu0 %v299
      %v1002 = vpop.f32.mrf.mxu0
      %v1003 = vadd.f32 0.0, %v1002
      %v1004 = vpop.f32.mrf.mxu0
      %1005 = vmatprep.mubr.f32.mxu0 0.0
      %1006 = vmatmul.mubr.f32.gmra.mxu0 %v302
      %v1007 = vpop.f32.mrf.mxu0
      %v1008 = vadd.f32 0.0, %v1007
      %v1009 = vpop.f32.mrf.mxu0
      %1010 = vmatprep.mubr.f32.mxu0 0.0
      %1011 = vmatmul.mubr.f32.gmra.mxu0 %v305
      %v1012 = vpop.f32.mrf.mxu0
      %v1013 = vadd.f32 0.0, %v1012
      %v1014 = vpop.f32.mrf.mxu0
      %1015 = vmatprep.mubr.f32.mxu0 0.0
      %1016 = vmatmul.mubr.f32.gmra.mxu0 %v308
      %v1017 = vpop.f32.mrf.mxu0
      %v1018 = vadd.f32 0.0, %v1017
      %v1019 = vpop.f32.mrf.mxu0
      %1020 = vmatprep.mubr.f32.mxu0 0.0
      %1021 = vmatmul.mubr.f32.gmra.mxu0 %v311
      %v1022 = vpop.f32.mrf.mxu0
      %v1023 = vadd.f32 0.0, %v1022
      %v1024 = vpop.f32.mrf.mxu0
      %1025 = vmatprep.mubr.f32.mxu0 0.0
      %1026 = vmatmul.mubr.f32.gmra.mxu0 %v314
      %v1027 = vpop.f32.mrf.mxu0
      %v1028 = vadd.f32 0.0, %v1027
      %v1029 = vpop.f32.mrf.mxu0
      %1030 = vmatprep.mubr.f32.mxu0 0.0
      %1031 = vmatmul.mubr.f32.gmra.mxu0 %v317
      %v1032 = vpop.f32.mrf.mxu0
      %v1033 = vadd.f32 0.0, %v1032
      %v1034 = vpop.f32.mrf.mxu0
      %1035 = vmatprep.mubr.f32.mxu0 0.0
      %1036 = vmatmul.mubr.f32.gmra.mxu0 %v320
      %v1037 = vpop.f32.mrf.mxu0
      %v1038 = vadd.f32 0.0, %v1037
      %v1039 = vpop.f32.mrf.mxu0
      %1040 = vmatprep.mubr.f32.mxu0 0.0
      %1041 = vmatmul.mubr.f32.gmra.mxu0 %v323
      %v1042 = vpop.f32.mrf.mxu0
      %v1043 = vadd.f32 0.0, %v1042
      %v1044 = vpop.f32.mrf.mxu0
      %1045 = vmatprep.mubr.f32.mxu0 0.0
      %1046 = vmatmul.mubr.f32.gmra.mxu0 %v326
      %v1047 = vpop.f32.mrf.mxu0
      %v1048 = vadd.f32 0.0, %v1047
      %v1049 = vpop.f32.mrf.mxu0
      %1050 = vmatprep.mubr.f32.mxu0 0.0
      %1051 = vmatmul.mubr.f32.gmra.mxu0 %v329
      %v1052 = vpop.f32.mrf.mxu0
      %v1053 = vadd.f32 0.0, %v1052
      %v1054 = vpop.f32.mrf.mxu0
      %1055 = vmatprep.mubr.f32.mxu0 0.0
      %1056 = vmatmul.mubr.f32.gmra.mxu0 %v332
      %v1057 = vpop.f32.mrf.mxu0
      %v1058 = vadd.f32 0.0, %v1057
      %v1059 = vpop.f32.mrf.mxu0
      %1060 = vmatprep.mubr.f32.mxu0 0.0
      %1061 = vmatmul.mubr.f32.gmra.mxu0 %v335
      %v1062 = vpop.f32.mrf.mxu0
      %v1063 = vadd.f32 0.0, %v1062
      %v1064 = vpop.f32.mrf.mxu0
      %1065 = vmatprep.mubr.f32.mxu0 0.0
      %1066 = vmatmul.mubr.f32.gmra.mxu0 %v338
      %v1067 = vpop.f32.mrf.mxu0
      %v1068 = vadd.f32 0.0, %v1067
      %v1069 = vpop.f32.mrf.mxu0
      %1070 = vmatprep.mubr.f32.mxu0 0.0
      %1071 = vmatmul.mubr.f32.gmra.mxu0 %v341
      %v1072 = vpop.f32.mrf.mxu0
      %v1073 = vadd.f32 0.0, %v1072
      %v1074 = vpop.f32.mrf.mxu0
      %1075 = vmatprep.mubr.f32.mxu0 0.0
      %1076 = vmatmul.mubr.f32.gmra.mxu0 %v344
      %v1077 = vpop.f32.mrf.mxu0
      %v1078 = vadd.f32 0.0, %v1077
      %v1079 = vpop.f32.mrf.mxu0
      %1080 = vmatprep.mubr.f32.mxu0 0.0
      %1081 = vmatmul.mubr.f32.gmra.mxu0 %v347
      %v1082 = vpop.f32.mrf.mxu0
      %v1083 = vadd.f32 0.0, %v1082
      %v1084 = vpop.f32.mrf.mxu0
      %1085 = vmatprep.mubr.f32.mxu0 0.0
      %1086 = vmatmul.mubr.f32.gmra.mxu0 %v350
      %v1087 = vpop.f32.mrf.mxu0
      %v1088 = vadd.f32 0.0, %v1087
      %v1089 = vpop.f32.mrf.mxu0
      %1090 = vmatprep.mubr.f32.mxu0 0.0
      %1091 = vmatmul.mubr.f32.gmra.mxu0 %v353
      %v1092 = vpop.f32.mrf.mxu0
      %v1093 = vadd.f32 0.0, %v1092
      %v1094 = vpop.f32.mrf.mxu0
      %1095 = vmatprep.mubr.f32.mxu0 0.0
      %1096 = vmatmul.mubr.f32.gmra.mxu0 %v356
      %v1097 = vpop.f32.mrf.mxu0
      %v1098 = vadd.f32 0.0, %v1097
      %v1099 = vpop.f32.mrf.mxu0
      %1100 = vmatprep.mubr.f32.mxu0 0.0
      %1101 = vmatmul.mubr.f32.gmra.mxu0 %v359
      %v1102 = vpop.f32.mrf.mxu0
      %v1103 = vadd.f32 0.0, %v1102
      %v1104 = vpop.f32.mrf.mxu0
      %1105 = vmatprep.mubr.f32.mxu0 0.0
      %1106 = vmatmul.mubr.f32.gmra.mxu0 %v625
      %v1107 = vpop.f32.mrf.mxu0
      %v1108 = vadd.f32 0.0, %v1107
      %v1109 = vpop.f32.mrf.mxu0
      %1110 = vmatprep.mubr.f32.mxu0 0.0
      %1111 = vmatmul.mubr.f32.gmra.mxu0 %v628
      %v1112 = vpop.f32.mrf.mxu0
      %v1113 = vadd.f32 0.0, %v1112
      %v1114 = vpop.f32.mrf.mxu0
      %1115 = vmatprep.mubr.f32.mxu0 0.0
      %1116 = vmatmul.mubr.f32.gmra.mxu0 %v893
      %v1117 = vpop.f32.mrf.mxu0
      %v1118 = vadd.f32 0.0, %v1117
      %v1119 = vpop.f32.mrf.mxu0
      %1120 = vmatprep.mubr.f32.mxu0 0.0
      %1121 = vmatmul.mubr.f32.gmra.mxu0 %v896
      %v1122 = vpop.f32.mrf.mxu0
      %v1123 = vadd.f32 0.0, %v1122
      %v1124 = vpop.f32.mrf.mxu0
      %1125 = vdwg.mxu0
      %v1126 = vadd.f32 %v858, %v968
      %v1127 = vadd.f32 %v859, %v973
      %v1128 = vadd.f32 %v860, %v978
      %v1129 = vadd.f32 %v861, %v983
      %v1130 = vadd.f32 %v862, %v988
      %v1131 = vadd.f32 %v863, %v993
      %v1132 = vadd.f32 %v864, %v998
      %v1133 = vadd.f32 %v865, %v1003
      %v1134 = vadd.f32 %v866, %v1008
      %v1135 = vadd.f32 %v867, %v1013
      %v1136 = vadd.f32 %v868, %v1018
      %v1137 = vadd.f32 %v869, %v1023
      %v1138 = vadd.f32 %v870, %v1028
      %v1139 = vadd.f32 %v871, %v1033
      %v1140 = vadd.f32 %v872, %v1038
      %v1141 = vadd.f32 %v873, %v1043
      %v1142 = vadd.f32 %v874, %v1048
      %v1143 = vadd.f32 %v875, %v1053
      %v1144 = vadd.f32 %v876, %v1058
      %v1145 = vadd.f32 %v877, %v1063
      %v1146 = vadd.f32 %v878, %v1068
      %v1147 = vadd.f32 %v879, %v1073
      %v1148 = vadd.f32 %v880, %v1078
      %v1149 = vadd.f32 %v881, %v1083
      %v1150 = vadd.f32 %v882, %v1088
      %v1151 = vadd.f32 %v883, %v1093
      %v1152 = vadd.f32 %v884, %v1098
      %v1153 = vadd.f32 %v885, %v1103
      %v1154 = vadd.f32 %v886, %v1108
      %v1155 = vadd.f32 %v887, %v1113
      %v1156 = vadd.f32 %v888, %v1118
      %v1157 = vadd.f32 %v889, %v1123
      %s1158 = scalar_lea.vmem %s1, 12
      %v1159 = vld [vmem:[%s1158] sm:$0xf]
      %v1161 = vsel %vm264, %v208, 0
      %v1164 = vsel %vm264, %v209, 0
      %v1167 = vsel %vm264, %v211, 0
      %v1170 = vsel %vm264, %v212, 0
      %v1173 = vsel %vm264, %v214, 0
      %v1176 = vsel %vm264, %v215, 0
      %v1179 = vsel %vm264, %v217, 0
      %v1182 = vsel %vm264, %v218, 0
      %v1185 = vsel %vm264, %v220, 0
      %v1188 = vsel %vm264, %v221, 0
      %v1191 = vsel %vm264, %v223, 0
      %v1194 = vsel %vm264, %v224, 0
      %v1197 = vsel %vm264, %v226, 0
      %v1200 = vsel %vm264, %v227, 0
      %v1203 = vsel %vm264, %v229, 0
      %v1206 = vsel %vm264, %v230, 0
      %v1209 = vsel %vm264, %v232, 0
      %v1212 = vsel %vm264, %v233, 0
      %v1215 = vsel %vm264, %v235, 0
      %v1218 = vsel %vm264, %v236, 0
      %v1221 = vsel %vm264, %v238, 0
      %v1224 = vsel %vm264, %v239, 0
      %v1227 = vsel %vm264, %v241, 0
      %v1230 = vsel %vm264, %v242, 0
      %v1233 = vsel %vm264, %v244, 0
      %v1236 = vsel %vm264, %v245, 0
      %v1239 = vsel %vm264, %v247, 0
      %v1242 = vsel %vm264, %v248, 0
      %v1245 = vsel %vm264, %v250, 0
      %v1248 = vsel %vm264, %v251, 0
      %v1251 = vsel %vm264, %v253, 0
      %v1254 = vsel %vm264, %v254, 0
      %v1257 = vsel %vm361, %v1159, 0
      %1259 = vmatprep.subr.mxu0 0.0
      %1260 = vmatpush1.msra.mxu0 0.0
      %1261 = vmatprep.subr.mxu0 0.0
      %1262 = vmatpush1.msra.mxu0 0.0
      %1263 = vmatprep.subr.mxu0 0.0
      %1264 = vmatpush1.msra.mxu0 0.0
      %1265 = vmatprep.subr.mxu0 0.0
      %1266 = vmatpush1.msra.mxu0 0.0
      %1267 = vmatprep.subr.mxu0 0.0
      %1268 = vmatpush1.msra.mxu0 0.0
      %1269 = vmatprep.subr.mxu0 0.0
      %1270 = vmatpush1.msra.mxu0 0.0
      %1271 = vmatprep.subr.mxu0 0.0
      %1272 = vmatpush1.msra.mxu0 0.0
      %1273 = vmatprep.subr.mxu0 0.0
      %1274 = vmatpush1.msra.mxu0 0.0
      %1275 = vmatprep.subr.mxu0 0.0
      %1276 = vmatpush1.msra.mxu0 0.0
      %1277 = vmatprep.subr.mxu0 0.0
      %1278 = vmatpush1.msra.mxu0 0.0
      %1279 = vmatprep.subr.mxu0 0.0
      %1280 = vmatpush1.msra.mxu0 0.0
      %1281 = vmatprep.subr.mxu0 0.0
      %1282 = vmatpush1.msra.mxu0 0.0
      %1283 = vmatprep.subr.mxu0 0.0
      %1284 = vmatpush1.msra.mxu0 0.0
      %1285 = vmatprep.subr.mxu0 0.0
      %1286 = vmatpush1.msra.mxu0 0.0
      %1287 = vmatprep.subr.mxu0 0.0
      %1288 = vmatpush1.msra.mxu0 0.0
      %1289 = vmatprep.subr.mxu0 0.0
      %1290 = vmatpush1.msra.mxu0 %v1257
      %1291 = vmatprep.subr.mxu0 0.0
      %1292 = vmatpush2.msra.mxu0 0.0
      %1293 = vmatprep.subr.mxu0 0.0
      %1294 = vmatpush2.msra.mxu0 0.0
      %1295 = vmatprep.subr.mxu0 0.0
      %1296 = vmatpush2.msra.mxu0 0.0
      %1297 = vmatprep.subr.mxu0 0.0
      %1298 = vmatpush2.msra.mxu0 0.0
      %1299 = vmatprep.subr.mxu0 0.0
      %1300 = vmatpush2.msra.mxu0 0.0
      %1301 = vmatprep.subr.mxu0 0.0
      %1302 = vmatpush2.msra.mxu0 0.0
      %1303 = vmatprep.subr.mxu0 0.0
      %1304 = vmatpush2.msra.mxu0 0.0
      %1305 = vmatprep.subr.mxu0 0.0
      %1306 = vmatpush2.msra.mxu0 0.0
      %1307 = vmatprep.subr.mxu0 0.0
      %1308 = vmatpush2.msra.mxu0 0.0
      %1309 = vmatprep.subr.mxu0 0.0
      %1310 = vmatpush2.msra.mxu0 0.0
      %1311 = vmatprep.subr.mxu0 0.0
      %1312 = vmatpush2.msra.mxu0 0.0
      %1313 = vmatprep.subr.mxu0 0.0
      %1314 = vmatpush2.msra.mxu0 0.0
      %1315 = vmatprep.subr.mxu0 0.0
      %1316 = vmatpush2.msra.mxu0 0.0
      %1317 = vmatprep.subr.mxu0 0.0
      %1318 = vmatpush2.msra.mxu0 0.0
      %1319 = vmatprep.subr.mxu0 0.0
      %1320 = vmatpush2.msra.mxu0 0.0
      %1321 = vmatprep.subr.mxu0 0.0
      %1322 = vmatpush2.msra.mxu0 0.0
      %1323 = vmatprep.mubr.f32.mxu0 0.0
      %1324 = vmatmul.mubr.f32.gmra.mxu0 %v1161
      %v1325 = vpop.f32.mrf.mxu0
      %v1326 = vadd.f32 0.0, %v1325
      %v1327 = vpop.f32.mrf.mxu0
      %1328 = vmatprep.mubr.f32.mxu0 0.0
      %1329 = vmatmul.mubr.f32.gmra.mxu0 %v1164
      %v1330 = vpop.f32.mrf.mxu0
      %v1331 = vadd.f32 0.0, %v1330
      %v1332 = vpop.f32.mrf.mxu0
      %1333 = vmatprep.mubr.f32.mxu0 0.0
      %1334 = vmatmul.mubr.f32.gmra.mxu0 %v1167
      %v1335 = vpop.f32.mrf.mxu0
      %v1336 = vadd.f32 0.0, %v1335
      %v1337 = vpop.f32.mrf.mxu0
      %1338 = vmatprep.mubr.f32.mxu0 0.0
      %1339 = vmatmul.mubr.f32.gmra.mxu0 %v1170
      %v1340 = vpop.f32.mrf.mxu0
      %v1341 = vadd.f32 0.0, %v1340
      %v1342 = vpop.f32.mrf.mxu0
      %1343 = vmatprep.mubr.f32.mxu0 0.0
      %1344 = vmatmul.mubr.f32.gmra.mxu0 %v1173
      %v1345 = vpop.f32.mrf.mxu0
      %v1346 = vadd.f32 0.0, %v1345
      %v1347 = vpop.f32.mrf.mxu0
      %1348 = vmatprep.mubr.f32.mxu0 0.0
      %1349 = vmatmul.mubr.f32.gmra.mxu0 %v1176
      %v1350 = vpop.f32.mrf.mxu0
      %v1351 = vadd.f32 0.0, %v1350
      %v1352 = vpop.f32.mrf.mxu0
      %1353 = vmatprep.mubr.f32.mxu0 0.0
      %1354 = vmatmul.mubr.f32.gmra.mxu0 %v1179
      %v1355 = vpop.f32.mrf.mxu0
      %v1356 = vadd.f32 0.0, %v1355
      %v1357 = vpop.f32.mrf.mxu0
      %1358 = vmatprep.mubr.f32.mxu0 0.0
      %1359 = vmatmul.mubr.f32.gmra.mxu0 %v1182
      %v1360 = vpop.f32.mrf.mxu0
      %v1361 = vadd.f32 0.0, %v1360
      %v1362 = vpop.f32.mrf.mxu0
      %1363 = vmatprep.mubr.f32.mxu0 0.0
      %1364 = vmatmul.mubr.f32.gmra.mxu0 %v1185
      %v1365 = vpop.f32.mrf.mxu0
      %v1366 = vadd.f32 0.0, %v1365
      %v1367 = vpop.f32.mrf.mxu0
      %1368 = vmatprep.mubr.f32.mxu0 0.0
      %1369 = vmatmul.mubr.f32.gmra.mxu0 %v1188
      %v1370 = vpop.f32.mrf.mxu0
      %v1371 = vadd.f32 0.0, %v1370
      %v1372 = vpop.f32.mrf.mxu0
      %1373 = vmatprep.mubr.f32.mxu0 0.0
      %1374 = vmatmul.mubr.f32.gmra.mxu0 %v1191
      %v1375 = vpop.f32.mrf.mxu0
      %v1376 = vadd.f32 0.0, %v1375
      %v1377 = vpop.f32.mrf.mxu0
      %1378 = vmatprep.mubr.f32.mxu0 0.0
      %1379 = vmatmul.mubr.f32.gmra.mxu0 %v1194
      %v1380 = vpop.f32.mrf.mxu0
      %v1381 = vadd.f32 0.0, %v1380
      %v1382 = vpop.f32.mrf.mxu0
      %1383 = vmatprep.mubr.f32.mxu0 0.0
      %1384 = vmatmul.mubr.f32.gmra.mxu0 %v1197
      %v1385 = vpop.f32.mrf.mxu0
      %v1386 = vadd.f32 0.0, %v1385
      %v1387 = vpop.f32.mrf.mxu0
      %1388 = vmatprep.mubr.f32.mxu0 0.0
      %1389 = vmatmul.mubr.f32.gmra.mxu0 %v1200
      %v1390 = vpop.f32.mrf.mxu0
      %v1391 = vadd.f32 0.0, %v1390
      %v1392 = vpop.f32.mrf.mxu0
      %1393 = vmatprep.mubr.f32.mxu0 0.0
      %1394 = vmatmul.mubr.f32.gmra.mxu0 %v1203
      %v1395 = vpop.f32.mrf.mxu0
      %v1396 = vadd.f32 0.0, %v1395
      %v1397 = vpop.f32.mrf.mxu0
      %1398 = vmatprep.mubr.f32.mxu0 0.0
      %1399 = vmatmul.mubr.f32.gmra.mxu0 %v1206
      %v1400 = vpop.f32.mrf.mxu0
      %v1401 = vadd.f32 0.0, %v1400
      %v1402 = vpop.f32.mrf.mxu0
      %1403 = vmatprep.mubr.f32.mxu0 0.0
      %1404 = vmatmul.mubr.f32.gmra.mxu0 %v1209
      %v1405 = vpop.f32.mrf.mxu0
      %v1406 = vadd.f32 0.0, %v1405
      %v1407 = vpop.f32.mrf.mxu0
      %1408 = vmatprep.mubr.f32.mxu0 0.0
      %1409 = vmatmul.mubr.f32.gmra.mxu0 %v1212
      %v1410 = vpop.f32.mrf.mxu0
      %v1411 = vadd.f32 0.0, %v1410
      %v1412 = vpop.f32.mrf.mxu0
      %1413 = vmatprep.mubr.f32.mxu0 0.0
      %1414 = vmatmul.mubr.f32.gmra.mxu0 %v1215
      %v1415 = vpop.f32.mrf.mxu0
      %v1416 = vadd.f32 0.0, %v1415
      %v1417 = vpop.f32.mrf.mxu0
      %1418 = vmatprep.mubr.f32.mxu0 0.0
      %1419 = vmatmul.mubr.f32.gmra.mxu0 %v1218
      %v1420 = vpop.f32.mrf.mxu0
      %v1421 = vadd.f32 0.0, %v1420
      %v1422 = vpop.f32.mrf.mxu0
      %1423 = vmatprep.mubr.f32.mxu0 0.0
      %1424 = vmatmul.mubr.f32.gmra.mxu0 %v1221
      %v1425 = vpop.f32.mrf.mxu0
      %v1426 = vadd.f32 0.0, %v1425
      %v1427 = vpop.f32.mrf.mxu0
      %1428 = vmatprep.mubr.f32.mxu0 0.0
      %1429 = vmatmul.mubr.f32.gmra.mxu0 %v1224
      %v1430 = vpop.f32.mrf.mxu0
      %v1431 = vadd.f32 0.0, %v1430
      %v1432 = vpop.f32.mrf.mxu0
      %1433 = vmatprep.mubr.f32.mxu0 0.0
      %1434 = vmatmul.mubr.f32.gmra.mxu0 %v1227
      %v1435 = vpop.f32.mrf.mxu0
      %v1436 = vadd.f32 0.0, %v1435
      %v1437 = vpop.f32.mrf.mxu0
      %1438 = vmatprep.mubr.f32.mxu0 0.0
      %1439 = vmatmul.mubr.f32.gmra.mxu0 %v1230
      %v1440 = vpop.f32.mrf.mxu0
      %v1441 = vadd.f32 0.0, %v1440
      %v1442 = vpop.f32.mrf.mxu0
      %1443 = vmatprep.mubr.f32.mxu0 0.0
      %1444 = vmatmul.mubr.f32.gmra.mxu0 %v1233
      %v1445 = vpop.f32.mrf.mxu0
      %v1446 = vadd.f32 0.0, %v1445
      %v1447 = vpop.f32.mrf.mxu0
      %1448 = vmatprep.mubr.f32.mxu0 0.0
      %1449 = vmatmul.mubr.f32.gmra.mxu0 %v1236
      %v1450 = vpop.f32.mrf.mxu0
      %v1451 = vadd.f32 0.0, %v1450
      %v1452 = vpop.f32.mrf.mxu0
      %1453 = vmatprep.mubr.f32.mxu0 0.0
      %1454 = vmatmul.mubr.f32.gmra.mxu0 %v1239
      %v1455 = vpop.f32.mrf.mxu0
      %v1456 = vadd.f32 0.0, %v1455
      %v1457 = vpop.f32.mrf.mxu0
      %1458 = vmatprep.mubr.f32.mxu0 0.0
      %1459 = vmatmul.mubr.f32.gmra.mxu0 %v1242
      %v1460 = vpop.f32.mrf.mxu0
      %v1461 = vadd.f32 0.0, %v1460
      %v1462 = vpop.f32.mrf.mxu0
      %1463 = vmatprep.mubr.f32.mxu0 0.0
      %1464 = vmatmul.mubr.f32.gmra.mxu0 %v1245
      %v1465 = vpop.f32.mrf.mxu0
      %v1466 = vadd.f32 0.0, %v1465
      %v1467 = vpop.f32.mrf.mxu0
      %1468 = vmatprep.mubr.f32.mxu0 0.0
      %1469 = vmatmul.mubr.f32.gmra.mxu0 %v1248
      %v1470 = vpop.f32.mrf.mxu0
      %v1471 = vadd.f32 0.0, %v1470
      %v1472 = vpop.f32.mrf.mxu0
      %1473 = vmatprep.mubr.f32.mxu0 0.0
      %1474 = vmatmul.mubr.f32.gmra.mxu0 %v1251
      %v1475 = vpop.f32.mrf.mxu0
      %v1476 = vadd.f32 0.0, %v1475
      %v1477 = vpop.f32.mrf.mxu0
      %1478 = vmatprep.mubr.f32.mxu0 0.0
      %1479 = vmatmul.mubr.f32.gmra.mxu0 %v1254
      %v1480 = vpop.f32.mrf.mxu0
      %v1481 = vadd.f32 0.0, %v1480
      %v1482 = vpop.f32.mrf.mxu0
      %1483 = vdwg.mxu0
      %v1484 = vadd.f32 %v1126, %v1326
      %v1485 = vadd.f32 %v1127, %v1331
      %v1486 = vadd.f32 %v1128, %v1336
      %v1487 = vadd.f32 %v1129, %v1341
      %v1488 = vadd.f32 %v1130, %v1346
      %v1489 = vadd.f32 %v1131, %v1351
      %v1490 = vadd.f32 %v1132, %v1356
      %v1491 = vadd.f32 %v1133, %v1361
      %v1492 = vadd.f32 %v1134, %v1366
      %v1493 = vadd.f32 %v1135, %v1371
      %v1494 = vadd.f32 %v1136, %v1376
      %v1495 = vadd.f32 %v1137, %v1381
      %v1496 = vadd.f32 %v1138, %v1386
      %v1497 = vadd.f32 %v1139, %v1391
      %v1498 = vadd.f32 %v1140, %v1396
      %v1499 = vadd.f32 %v1141, %v1401
      %v1500 = vadd.f32 %v1142, %v1406
      %v1501 = vadd.f32 %v1143, %v1411
      %v1502 = vadd.f32 %v1144, %v1416
      %v1503 = vadd.f32 %v1145, %v1421
      %v1504 = vadd.f32 %v1146, %v1426
      %v1505 = vadd.f32 %v1147, %v1431
      %v1506 = vadd.f32 %v1148, %v1436
      %v1507 = vadd.f32 %v1149, %v1441
      %v1508 = vadd.f32 %v1150, %v1446
      %v1509 = vadd.f32 %v1151, %v1451
      %v1510 = vadd.f32 %v1152, %v1456
      %v1511 = vadd.f32 %v1153, %v1461
      %v1512 = vadd.f32 %v1154, %v1466
      %v1513 = vadd.f32 %v1155, %v1471
      %v1514 = vadd.f32 %v1156, %v1476
      %v1515 = vadd.f32 %v1157, %v1481
      %vm1532 = vcmask 1046528
      %v1533 = vrot.slane %v208, 1
      %v1534 = vrot.slane %v209, 1
      %v1535 = vsel %vm1532, %v1533, %v1534
      %v1536 = vrot.slane %v210, 1
      %v1537 = vsel %vm1532, %v1534, %v1536
      %v1538 = vrot.slane %v211, 1
      %v1539 = vrot.slane %v212, 1
      %v1540 = vsel %vm1532, %v1538, %v1539
      %v1541 = vrot.slane %v213, 1
      %v1542 = vsel %vm1532, %v1539, %v1541
      %v1543 = vrot.slane %v214, 1
      %v1544 = vrot.slane %v215, 1
      %v1545 = vsel %vm1532, %v1543, %v1544
      %v1546 = vrot.slane %v216, 1
      %v1547 = vsel %vm1532, %v1544, %v1546
      %v1548 = vrot.slane %v217, 1
      %v1549 = vrot.slane %v218, 1
      %v1550 = vsel %vm1532, %v1548, %v1549
      %v1551 = vrot.slane %v219, 1
      %v1552 = vsel %vm1532, %v1549, %v1551
      %v1553 = vrot.slane %v220, 1
      %v1554 = vrot.slane %v221, 1
      %v1555 = vsel %vm1532, %v1553, %v1554
      %v1556 = vrot.slane %v222, 1
      %v1557 = vsel %vm1532, %v1554, %v1556
      %v1558 = vrot.slane %v223, 1
      %v1559 = vrot.slane %v224, 1
      %v1560 = vsel %vm1532, %v1558, %v1559
      %v1561 = vrot.slane %v225, 1
      %v1562 = vsel %vm1532, %v1559, %v1561
      %v1563 = vrot.slane %v226, 1
      %v1564 = vrot.slane %v227, 1
      %v1565 = vsel %vm1532, %v1563, %v1564
      %v1566 = vrot.slane %v228, 1
      %v1567 = vsel %vm1532, %v1564, %v1566
      %v1568 = vrot.slane %v229, 1
      %v1569 = vrot.slane %v230, 1
      %v1570 = vsel %vm1532, %v1568, %v1569
      %v1571 = vrot.slane %v231, 1
      %v1572 = vsel %vm1532, %v1569, %v1571
      %v1573 = vrot.slane %v232, 1
      %v1574 = vrot.slane %v233, 1
      %v1575 = vsel %vm1532, %v1573, %v1574
      %v1576 = vrot.slane %v234, 1
      %v1577 = vsel %vm1532, %v1574, %v1576
      %v1578 = vrot.slane %v235, 1
      %v1579 = vrot.slane %v236, 1
      %v1580 = vsel %vm1532, %v1578, %v1579
      %v1581 = vrot.slane %v237, 1
      %v1582 = vsel %vm1532, %v1579, %v1581
      %v1583 = vrot.slane %v238, 1
      %v1584 = vrot.slane %v239, 1
      %v1585 = vsel %vm1532, %v1583, %v1584
      %v1586 = vrot.slane %v240, 1
      %v1587 = vsel %vm1532, %v1584, %v1586
      %v1588 = vrot.slane %v241, 1
      %v1589 = vrot.slane %v242, 1
      %v1590 = vsel %vm1532, %v1588, %v1589
      %v1591 = vrot.slane %v243, 1
      %v1592 = vsel %vm1532, %v1589, %v1591
      %v1593 = vrot.slane %v244, 1
      %v1594 = vrot.slane %v245, 1
      %v1595 = vsel %vm1532, %v1593, %v1594
      %v1596 = vrot.slane %v246, 1
      %v1597 = vsel %vm1532, %v1594, %v1596
      %v1598 = vrot.slane %v247, 1
      %v1599 = vrot.slane %v248, 1
      %v1600 = vsel %vm1532, %v1598, %v1599
      %v1601 = vrot.slane %v249, 1
      %v1602 = vsel %vm1532, %v1599, %v1601
      %v1603 = vrot.slane %v250, 1
      %v1604 = vrot.slane %v251, 1
      %v1605 = vsel %vm1532, %v1603, %v1604
      %v1606 = vrot.slane %v252, 1
      %v1607 = vsel %vm1532, %v1604, %v1606
      %v1608 = vrot.slane %v253, 1
      %v1609 = vrot.slane %v254, 1
      %v1610 = vsel %vm1532, %v1608, %v1609
      %v1611 = vrot.slane %v255, 1
      %v1612 = vsel %vm1532, %v1609, %v1611
      %s1613 = scalar_lea.vmem %s1, 16
      %v1614 = vld [vmem:[%s1613] sm:$0xf]
      %v1615 = vsel %vm264, %v1535, 0
      %v1617 = vsel %vm264, %v1537, 0
      %v1619 = vsel %vm264, %v1540, 0
      %v1621 = vsel %vm264, %v1542, 0
      %v1623 = vsel %vm264, %v1545, 0
      %v1625 = vsel %vm264, %v1547, 0
      %v1627 = vsel %vm264, %v1550, 0
      %v1629 = vsel %vm264, %v1552, 0
      %v1631 = vsel %vm264, %v1555, 0
      %v1633 = vsel %vm264, %v1557, 0
      %v1635 = vsel %vm264, %v1560, 0
      %v1637 = vsel %vm264, %v1562, 0
      %v1639 = vsel %vm264, %v1565, 0
      %v1641 = vsel %vm264, %v1567, 0
      %v1643 = vsel %vm264, %v1570, 0
      %v1645 = vsel %vm264, %v1572, 0
      %v1647 = vsel %vm264, %v1575, 0
      %v1649 = vsel %vm264, %v1577, 0
      %v1651 = vsel %vm264, %v1580, 0
      %v1653 = vsel %vm264, %v1582, 0
      %v1655 = vsel %vm264, %v1585, 0
      %v1657 = vsel %vm264, %v1587, 0
      %v1659 = vsel %vm264, %v1590, 0
      %v1661 = vsel %vm264, %v1592, 0
      %v1663 = vsel %vm264, %v1595, 0
      %v1665 = vsel %vm264, %v1597, 0
      %v1667 = vsel %vm264, %v1600, 0
      %v1669 = vsel %vm264, %v1602, 0
      %v1671 = vsel %vm264, %v1605, 0
      %v1673 = vsel %vm264, %v1607, 0
      %v1675 = vsel %vm264, %v1610, 0
      %v1677 = vsel %vm264, %v1612, 0
      %v1680 = vsel %vm361, %v1614, 0
      %1682 = vmatprep.subr.mxu0 0.0
      %1683 = vmatpush1.msra.mxu0 0.0
      %1684 = vmatprep.subr.mxu0 0.0
      %1685 = vmatpush1.msra.mxu0 0.0
      %1686 = vmatprep.subr.mxu0 0.0
      %1687 = vmatpush1.msra.mxu0 0.0
      %1688 = vmatprep.subr.mxu0 0.0
      %1689 = vmatpush1.msra.mxu0 0.0
      %1690 = vmatprep.subr.mxu0 0.0
      %1691 = vmatpush1.msra.mxu0 0.0
      %1692 = vmatprep.subr.mxu0 0.0
      %1693 = vmatpush1.msra.mxu0 0.0
      %1694 = vmatprep.subr.mxu0 0.0
      %1695 = vmatpush1.msra.mxu0 0.0
      %1696 = vmatprep.subr.mxu0 0.0
      %1697 = vmatpush1.msra.mxu0 0.0
      %1698 = vmatprep.subr.mxu0 0.0
      %1699 = vmatpush1.msra.mxu0 0.0
      %1700 = vmatprep.subr.mxu0 0.0
      %1701 = vmatpush1.msra.mxu0 0.0
      %1702 = vmatprep.subr.mxu0 0.0
      %1703 = vmatpush1.msra.mxu0 0.0
      %1704 = vmatprep.subr.mxu0 0.0
      %1705 = vmatpush1.msra.mxu0 0.0
      %1706 = vmatprep.subr.mxu0 0.0
      %1707 = vmatpush1.msra.mxu0 0.0
      %1708 = vmatprep.subr.mxu0 0.0
      %1709 = vmatpush1.msra.mxu0 0.0
      %1710 = vmatprep.subr.mxu0 0.0
      %1711 = vmatpush1.msra.mxu0 0.0
      %1712 = vmatprep.subr.mxu0 0.0
      %1713 = vmatpush1.msra.mxu0 %v1680
      %1714 = vmatprep.subr.mxu0 0.0
      %1715 = vmatpush2.msra.mxu0 0.0
      %1716 = vmatprep.subr.mxu0 0.0
      %1717 = vmatpush2.msra.mxu0 0.0
      %1718 = vmatprep.subr.mxu0 0.0
      %1719 = vmatpush2.msra.mxu0 0.0
      %1720 = vmatprep.subr.mxu0 0.0
      %1721 = vmatpush2.msra.mxu0 0.0
      %1722 = vmatprep.subr.mxu0 0.0
      %1723 = vmatpush2.msra.mxu0 0.0
      %1724 = vmatprep.subr.mxu0 0.0
      %1725 = vmatpush2.msra.mxu0 0.0
      %1726 = vmatprep.subr.mxu0 0.0
      %1727 = vmatpush2.msra.mxu0 0.0
      %1728 = vmatprep.subr.mxu0 0.0
      %1729 = vmatpush2.msra.mxu0 0.0
      %1730 = vmatprep.subr.mxu0 0.0
      %1731 = vmatpush2.msra.mxu0 0.0
      %1732 = vmatprep.subr.mxu0 0.0
      %1733 = vmatpush2.msra.mxu0 0.0
      %1734 = vmatprep.subr.mxu0 0.0
      %1735 = vmatpush2.msra.mxu0 0.0
      %1736 = vmatprep.subr.mxu0 0.0
      %1737 = vmatpush2.msra.mxu0 0.0
      %1738 = vmatprep.subr.mxu0 0.0
      %1739 = vmatpush2.msra.mxu0 0.0
      %1740 = vmatprep.subr.mxu0 0.0
      %1741 = vmatpush2.msra.mxu0 0.0
      %1742 = vmatprep.subr.mxu0 0.0
      %1743 = vmatpush2.msra.mxu0 0.0
      %1744 = vmatprep.subr.mxu0 0.0
      %1745 = vmatpush2.msra.mxu0 0.0
      %1746 = vmatprep.mubr.f32.mxu0 0.0
      %1747 = vmatmul.mubr.f32.gmra.mxu0 %v1615
      %v1748 = vpop.f32.mrf.mxu0
      %v1749 = vadd.f32 0.0, %v1748
      %v1750 = vpop.f32.mrf.mxu0
      %1751 = vmatprep.mubr.f32.mxu0 0.0
      %1752 = vmatmul.mubr.f32.gmra.mxu0 %v1617
      %v1753 = vpop.f32.mrf.mxu0
      %v1754 = vadd.f32 0.0, %v1753
      %v1755 = vpop.f32.mrf.mxu0
      %1756 = vmatprep.mubr.f32.mxu0 0.0
      %1757 = vmatmul.mubr.f32.gmra.mxu0 %v1619
      %v1758 = vpop.f32.mrf.mxu0
      %v1759 = vadd.f32 0.0, %v1758
      %v1760 = vpop.f32.mrf.mxu0
      %1761 = vmatprep.mubr.f32.mxu0 0.0
      %1762 = vmatmul.mubr.f32.gmra.mxu0 %v1621
      %v1763 = vpop.f32.mrf.mxu0
      %v1764 = vadd.f32 0.0, %v1763
      %v1765 = vpop.f32.mrf.mxu0
      %1766 = vmatprep.mubr.f32.mxu0 0.0
      %1767 = vmatmul.mubr.f32.gmra.mxu0 %v1623
      %v1768 = vpop.f32.mrf.mxu0
      %v1769 = vadd.f32 0.0, %v1768
      %v1770 = vpop.f32.mrf.mxu0
      %1771 = vmatprep.mubr.f32.mxu0 0.0
      %1772 = vmatmul.mubr.f32.gmra.mxu0 %v1625
      %v1773 = vpop.f32.mrf.mxu0
      %v1774 = vadd.f32 0.0, %v1773
      %v1775 = vpop.f32.mrf.mxu0
      %1776 = vmatprep.mubr.f32.mxu0 0.0
      %1777 = vmatmul.mubr.f32.gmra.mxu0 %v1627
      %v1778 = vpop.f32.mrf.mxu0
      %v1779 = vadd.f32 0.0, %v1778
      %v1780 = vpop.f32.mrf.mxu0
      %1781 = vmatprep.mubr.f32.mxu0 0.0
      %1782 = vmatmul.mubr.f32.gmra.mxu0 %v1629
      %v1783 = vpop.f32.mrf.mxu0
      %v1784 = vadd.f32 0.0, %v1783
      %v1785 = vpop.f32.mrf.mxu0
      %1786 = vmatprep.mubr.f32.mxu0 0.0
      %1787 = vmatmul.mubr.f32.gmra.mxu0 %v1631
      %v1788 = vpop.f32.mrf.mxu0
      %v1789 = vadd.f32 0.0, %v1788
      %v1790 = vpop.f32.mrf.mxu0
      %1791 = vmatprep.mubr.f32.mxu0 0.0
      %1792 = vmatmul.mubr.f32.gmra.mxu0 %v1633
      %v1793 = vpop.f32.mrf.mxu0
      %v1794 = vadd.f32 0.0, %v1793
      %v1795 = vpop.f32.mrf.mxu0
      %1796 = vmatprep.mubr.f32.mxu0 0.0
      %1797 = vmatmul.mubr.f32.gmra.mxu0 %v1635
      %v1798 = vpop.f32.mrf.mxu0
      %v1799 = vadd.f32 0.0, %v1798
      %v1800 = vpop.f32.mrf.mxu0
      %1801 = vmatprep.mubr.f32.mxu0 0.0
      %1802 = vmatmul.mubr.f32.gmra.mxu0 %v1637
      %v1803 = vpop.f32.mrf.mxu0
      %v1804 = vadd.f32 0.0, %v1803
      %v1805 = vpop.f32.mrf.mxu0
      %1806 = vmatprep.mubr.f32.mxu0 0.0
      %1807 = vmatmul.mubr.f32.gmra.mxu0 %v1639
      %v1808 = vpop.f32.mrf.mxu0
      %v1809 = vadd.f32 0.0, %v1808
      %v1810 = vpop.f32.mrf.mxu0
      %1811 = vmatprep.mubr.f32.mxu0 0.0
      %1812 = vmatmul.mubr.f32.gmra.mxu0 %v1641
      %v1813 = vpop.f32.mrf.mxu0
      %v1814 = vadd.f32 0.0, %v1813
      %v1815 = vpop.f32.mrf.mxu0
      %1816 = vmatprep.mubr.f32.mxu0 0.0
      %1817 = vmatmul.mubr.f32.gmra.mxu0 %v1643
      %v1818 = vpop.f32.mrf.mxu0
      %v1819 = vadd.f32 0.0, %v1818
      %v1820 = vpop.f32.mrf.mxu0
      %1821 = vmatprep.mubr.f32.mxu0 0.0
      %1822 = vmatmul.mubr.f32.gmra.mxu0 %v1645
      %v1823 = vpop.f32.mrf.mxu0
      %v1824 = vadd.f32 0.0, %v1823
      %v1825 = vpop.f32.mrf.mxu0
      %1826 = vmatprep.mubr.f32.mxu0 0.0
      %1827 = vmatmul.mubr.f32.gmra.mxu0 %v1647
      %v1828 = vpop.f32.mrf.mxu0
      %v1829 = vadd.f32 0.0, %v1828
      %v1830 = vpop.f32.mrf.mxu0
      %1831 = vmatprep.mubr.f32.mxu0 0.0
      %1832 = vmatmul.mubr.f32.gmra.mxu0 %v1649
      %v1833 = vpop.f32.mrf.mxu0
      %v1834 = vadd.f32 0.0, %v1833
      %v1835 = vpop.f32.mrf.mxu0
      %1836 = vmatprep.mubr.f32.mxu0 0.0
      %1837 = vmatmul.mubr.f32.gmra.mxu0 %v1651
      %v1838 = vpop.f32.mrf.mxu0
      %v1839 = vadd.f32 0.0, %v1838
      %v1840 = vpop.f32.mrf.mxu0
      %1841 = vmatprep.mubr.f32.mxu0 0.0
      %1842 = vmatmul.mubr.f32.gmra.mxu0 %v1653
      %v1843 = vpop.f32.mrf.mxu0
      %v1844 = vadd.f32 0.0, %v1843
      %v1845 = vpop.f32.mrf.mxu0
      %1846 = vmatprep.mubr.f32.mxu0 0.0
      %1847 = vmatmul.mubr.f32.gmra.mxu0 %v1655
      %v1848 = vpop.f32.mrf.mxu0
      %v1849 = vadd.f32 0.0, %v1848
      %v1850 = vpop.f32.mrf.mxu0
      %1851 = vmatprep.mubr.f32.mxu0 0.0
      %1852 = vmatmul.mubr.f32.gmra.mxu0 %v1657
      %v1853 = vpop.f32.mrf.mxu0
      %v1854 = vadd.f32 0.0, %v1853
      %v1855 = vpop.f32.mrf.mxu0
      %1856 = vmatprep.mubr.f32.mxu0 0.0
      %1857 = vmatmul.mubr.f32.gmra.mxu0 %v1659
      %v1858 = vpop.f32.mrf.mxu0
      %v1859 = vadd.f32 0.0, %v1858
      %v1860 = vpop.f32.mrf.mxu0
      %1861 = vmatprep.mubr.f32.mxu0 0.0
      %1862 = vmatmul.mubr.f32.gmra.mxu0 %v1661
      %v1863 = vpop.f32.mrf.mxu0
      %v1864 = vadd.f32 0.0, %v1863
      %v1865 = vpop.f32.mrf.mxu0
      %1866 = vmatprep.mubr.f32.mxu0 0.0
      %1867 = vmatmul.mubr.f32.gmra.mxu0 %v1663
      %v1868 = vpop.f32.mrf.mxu0
      %v1869 = vadd.f32 0.0, %v1868
      %v1870 = vpop.f32.mrf.mxu0
      %1871 = vmatprep.mubr.f32.mxu0 0.0
      %1872 = vmatmul.mubr.f32.gmra.mxu0 %v1665
      %v1873 = vpop.f32.mrf.mxu0
      %v1874 = vadd.f32 0.0, %v1873
      %v1875 = vpop.f32.mrf.mxu0
      %1876 = vmatprep.mubr.f32.mxu0 0.0
      %1877 = vmatmul.mubr.f32.gmra.mxu0 %v1667
      %v1878 = vpop.f32.mrf.mxu0
      %v1879 = vadd.f32 0.0, %v1878
      %v1880 = vpop.f32.mrf.mxu0
      %1881 = vmatprep.mubr.f32.mxu0 0.0
      %1882 = vmatmul.mubr.f32.gmra.mxu0 %v1669
      %v1883 = vpop.f32.mrf.mxu0
      %v1884 = vadd.f32 0.0, %v1883
      %v1885 = vpop.f32.mrf.mxu0
      %1886 = vmatprep.mubr.f32.mxu0 0.0
      %1887 = vmatmul.mubr.f32.gmra.mxu0 %v1671
      %v1888 = vpop.f32.mrf.mxu0
      %v1889 = vadd.f32 0.0, %v1888
      %v1890 = vpop.f32.mrf.mxu0
      %1891 = vmatprep.mubr.f32.mxu0 0.0
      %1892 = vmatmul.mubr.f32.gmra.mxu0 %v1673
      %v1893 = vpop.f32.mrf.mxu0
      %v1894 = vadd.f32 0.0, %v1893
      %v1895 = vpop.f32.mrf.mxu0
      %1896 = vmatprep.mubr.f32.mxu0 0.0
      %1897 = vmatmul.mubr.f32.gmra.mxu0 %v1675
      %v1898 = vpop.f32.mrf.mxu0
      %v1899 = vadd.f32 0.0, %v1898
      %v1900 = vpop.f32.mrf.mxu0
      %1901 = vmatprep.mubr.f32.mxu0 0.0
      %1902 = vmatmul.mubr.f32.gmra.mxu0 %v1677
      %v1903 = vpop.f32.mrf.mxu0
      %v1904 = vadd.f32 0.0, %v1903
      %v1905 = vpop.f32.mrf.mxu0
      %1906 = vdwg.mxu0
      %v1907 = vadd.f32 %v1484, %v1749
      %v1908 = vadd.f32 %v1485, %v1754
      %v1909 = vadd.f32 %v1486, %v1759
      %v1910 = vadd.f32 %v1487, %v1764
      %v1911 = vadd.f32 %v1488, %v1769
      %v1912 = vadd.f32 %v1489, %v1774
      %v1913 = vadd.f32 %v1490, %v1779
      %v1914 = vadd.f32 %v1491, %v1784
      %v1915 = vadd.f32 %v1492, %v1789
      %v1916 = vadd.f32 %v1493, %v1794
      %v1917 = vadd.f32 %v1494, %v1799
      %v1918 = vadd.f32 %v1495, %v1804
      %v1919 = vadd.f32 %v1496, %v1809
      %v1920 = vadd.f32 %v1497, %v1814
      %v1921 = vadd.f32 %v1498, %v1819
      %v1922 = vadd.f32 %v1499, %v1824
      %v1923 = vadd.f32 %v1500, %v1829
      %v1924 = vadd.f32 %v1501, %v1834
      %v1925 = vadd.f32 %v1502, %v1839
      %v1926 = vadd.f32 %v1503, %v1844
      %v1927 = vadd.f32 %v1504, %v1849
      %v1928 = vadd.f32 %v1505, %v1854
      %v1929 = vadd.f32 %v1506, %v1859
      %v1930 = vadd.f32 %v1507, %v1864
      %v1931 = vadd.f32 %v1508, %v1869
      %v1932 = vadd.f32 %v1509, %v1874
      %v1933 = vadd.f32 %v1510, %v1879
      %v1934 = vadd.f32 %v1511, %v1884
      %v1935 = vadd.f32 %v1512, %v1889
      %v1936 = vadd.f32 %v1513, %v1894
      %v1937 = vadd.f32 %v1514, %v1899
      %v1938 = vadd.f32 %v1515, %v1904
      %vm1939 = vcmask 1045504
      %v1940 = vrot.slane %v208, 2
      %v1941 = vrot.slane %v209, 2
      %v1942 = vsel %vm1939, %v1940, %v1941
      %v1943 = vrot.slane %v210, 2
      %v1944 = vsel %vm1939, %v1941, %v1943
      %v1945 = vrot.slane %v211, 2
      %v1946 = vrot.slane %v212, 2
      %v1947 = vsel %vm1939, %v1945, %v1946
      %v1948 = vrot.slane %v213, 2
      %v1949 = vsel %vm1939, %v1946, %v1948
      %v1950 = vrot.slane %v214, 2
      %v1951 = vrot.slane %v215, 2
      %v1952 = vsel %vm1939, %v1950, %v1951
      %v1953 = vrot.slane %v216, 2
      %v1954 = vsel %vm1939, %v1951, %v1953
      %v1955 = vrot.slane %v217, 2
      %v1956 = vrot.slane %v218, 2
      %v1957 = vsel %vm1939, %v1955, %v1956
      %v1958 = vrot.slane %v219, 2
      %v1959 = vsel %vm1939, %v1956, %v1958
      %v1960 = vrot.slane %v220, 2
      %v1961 = vrot.slane %v221, 2
      %v1962 = vsel %vm1939, %v1960, %v1961
      %v1963 = vrot.slane %v222, 2
      %v1964 = vsel %vm1939, %v1961, %v1963
      %v1965 = vrot.slane %v223, 2
      %v1966 = vrot.slane %v224, 2
      %v1967 = vsel %vm1939, %v1965, %v1966
      %v1968 = vrot.slane %v225, 2
      %v1969 = vsel %vm1939, %v1966, %v1968
      %v1970 = vrot.slane %v226, 2
      %v1971 = vrot.slane %v227, 2
      %v1972 = vsel %vm1939, %v1970, %v1971
      %v1973 = vrot.slane %v228, 2
      %v1974 = vsel %vm1939, %v1971, %v1973
      %v1975 = vrot.slane %v229, 2
      %v1976 = vrot.slane %v230, 2
      %v1977 = vsel %vm1939, %v1975, %v1976
      %v1978 = vrot.slane %v231, 2
      %v1979 = vsel %vm1939, %v1976, %v1978
      %v1980 = vrot.slane %v232, 2
      %v1981 = vrot.slane %v233, 2
      %v1982 = vsel %vm1939, %v1980, %v1981
      %v1983 = vrot.slane %v234, 2
      %v1984 = vsel %vm1939, %v1981, %v1983
      %v1985 = vrot.slane %v235, 2
      %v1986 = vrot.slane %v236, 2
      %v1987 = vsel %vm1939, %v1985, %v1986
      %v1988 = vrot.slane %v237, 2
      %v1989 = vsel %vm1939, %v1986, %v1988
      %v1990 = vrot.slane %v238, 2
      %v1991 = vrot.slane %v239, 2
      %v1992 = vsel %vm1939, %v1990, %v1991
      %v1993 = vrot.slane %v240, 2
      %v1994 = vsel %vm1939, %v1991, %v1993
      %v1995 = vrot.slane %v241, 2
      %v1996 = vrot.slane %v242, 2
      %v1997 = vsel %vm1939, %v1995, %v1996
      %v1998 = vrot.slane %v243, 2
      %v1999 = vsel %vm1939, %v1996, %v1998
      %v2000 = vrot.slane %v244, 2
      %v2001 = vrot.slane %v245, 2
      %v2002 = vsel %vm1939, %v2000, %v2001
      %v2003 = vrot.slane %v246, 2
      %v2004 = vsel %vm1939, %v2001, %v2003
      %v2005 = vrot.slane %v247, 2
      %v2006 = vrot.slane %v248, 2
      %v2007 = vsel %vm1939, %v2005, %v2006
      %v2008 = vrot.slane %v249, 2
      %v2009 = vsel %vm1939, %v2006, %v2008
      %v2010 = vrot.slane %v250, 2
      %v2011 = vrot.slane %v251, 2
      %v2012 = vsel %vm1939, %v2010, %v2011
      %v2013 = vrot.slane %v252, 2
      %v2014 = vsel %vm1939, %v2011, %v2013
      %v2015 = vrot.slane %v253, 2
      %v2016 = vrot.slane %v254, 2
      %v2017 = vsel %vm1939, %v2015, %v2016
      %v2018 = vrot.slane %v255, 2
      %v2019 = vsel %vm1939, %v2016, %v2018
      %s2020 = scalar_lea.vmem %s1, 20
      %v2021 = vld [vmem:[%s2020] sm:$0xf]
      %v2022 = vsel %vm264, %v1942, 0
      %v2024 = vsel %vm264, %v1944, 0
      %v2026 = vsel %vm264, %v1947, 0
      %v2028 = vsel %vm264, %v1949, 0
      %v2030 = vsel %vm264, %v1952, 0
      %v2032 = vsel %vm264, %v1954, 0
      %v2034 = vsel %vm264, %v1957, 0
      %v2036 = vsel %vm264, %v1959, 0
      %v2038 = vsel %vm264, %v1962, 0
      %v2040 = vsel %vm264, %v1964, 0
      %v2042 = vsel %vm264, %v1967, 0
      %v2044 = vsel %vm264, %v1969, 0
      %v2046 = vsel %vm264, %v1972, 0
      %v2048 = vsel %vm264, %v1974, 0
      %v2050 = vsel %vm264, %v1977, 0
      %v2052 = vsel %vm264, %v1979, 0
      %v2054 = vsel %vm264, %v1982, 0
      %v2056 = vsel %vm264, %v1984, 0
      %v2058 = vsel %vm264, %v1987, 0
      %v2060 = vsel %vm264, %v1989, 0
      %v2062 = vsel %vm264, %v1992, 0
      %v2064 = vsel %vm264, %v1994, 0
      %v2066 = vsel %vm264, %v1997, 0
      %v2068 = vsel %vm264, %v1999, 0
      %v2070 = vsel %vm264, %v2002, 0
      %v2072 = vsel %vm264, %v2004, 0
      %v2074 = vsel %vm264, %v2007, 0
      %v2076 = vsel %vm264, %v2009, 0
      %v2078 = vsel %vm264, %v2012, 0
      %v2080 = vsel %vm264, %v2014, 0
      %v2082 = vsel %vm264, %v2017, 0
      %v2084 = vsel %vm264, %v2019, 0
      %v2087 = vsel %vm361, %v2021, 0
      %2089 = vmatprep.subr.mxu0 0.0
      %2090 = vmatpush1.msra.mxu0 0.0
      %2091 = vmatprep.subr.mxu0 0.0
      %2092 = vmatpush1.msra.mxu0 0.0
      %2093 = vmatprep.subr.mxu0 0.0
      %2094 = vmatpush1.msra.mxu0 0.0
      %2095 = vmatprep.subr.mxu0 0.0
      %2096 = vmatpush1.msra.mxu0 0.0
      %2097 = vmatprep.subr.mxu0 0.0
      %2098 = vmatpush1.msra.mxu0 0.0
      %2099 = vmatprep.subr.mxu0 0.0
      %2100 = vmatpush1.msra.mxu0 0.0
      %2101 = vmatprep.subr.mxu0 0.0
      %2102 = vmatpush1.msra.mxu0 0.0
      %2103 = vmatprep.subr.mxu0 0.0
      %2104 = vmatpush1.msra.mxu0 0.0
      %2105 = vmatprep.subr.mxu0 0.0
      %2106 = vmatpush1.msra.mxu0 0.0
      %2107 = vmatprep.subr.mxu0 0.0
      %2108 = vmatpush1.msra.mxu0 0.0
      %2109 = vmatprep.subr.mxu0 0.0
      %2110 = vmatpush1.msra.mxu0 0.0
      %2111 = vmatprep.subr.mxu0 0.0
      %2112 = vmatpush1.msra.mxu0 0.0
      %2113 = vmatprep.subr.mxu0 0.0
      %2114 = vmatpush1.msra.mxu0 0.0
      %2115 = vmatprep.subr.mxu0 0.0
      %2116 = vmatpush1.msra.mxu0 0.0
      %2117 = vmatprep.subr.mxu0 0.0
      %2118 = vmatpush1.msra.mxu0 0.0
      %2119 = vmatprep.subr.mxu0 0.0
      %2120 = vmatpush1.msra.mxu0 %v2087
      %2121 = vmatprep.subr.mxu0 0.0
      %2122 = vmatpush2.msra.mxu0 0.0
      %2123 = vmatprep.subr.mxu0 0.0
      %2124 = vmatpush2.msra.mxu0 0.0
      %2125 = vmatprep.subr.mxu0 0.0
      %2126 = vmatpush2.msra.mxu0 0.0
      %2127 = vmatprep.subr.mxu0 0.0
      %2128 = vmatpush2.msra.mxu0 0.0
      %2129 = vmatprep.subr.mxu0 0.0
      %2130 = vmatpush2.msra.mxu0 0.0
      %2131 = vmatprep.subr.mxu0 0.0
      %2132 = vmatpush2.msra.mxu0 0.0
      %2133 = vmatprep.subr.mxu0 0.0
      %2134 = vmatpush2.msra.mxu0 0.0
      %2135 = vmatprep.subr.mxu0 0.0
      %2136 = vmatpush2.msra.mxu0 0.0
      %2137 = vmatprep.subr.mxu0 0.0
      %2138 = vmatpush2.msra.mxu0 0.0
      %2139 = vmatprep.subr.mxu0 0.0
      %2140 = vmatpush2.msra.mxu0 0.0
      %2141 = vmatprep.subr.mxu0 0.0
      %2142 = vmatpush2.msra.mxu0 0.0
      %2143 = vmatprep.subr.mxu0 0.0
      %2144 = vmatpush2.msra.mxu0 0.0
      %2145 = vmatprep.subr.mxu0 0.0
      %2146 = vmatpush2.msra.mxu0 0.0
      %2147 = vmatprep.subr.mxu0 0.0
      %2148 = vmatpush2.msra.mxu0 0.0
      %2149 = vmatprep.subr.mxu0 0.0
      %2150 = vmatpush2.msra.mxu0 0.0
      %2151 = vmatprep.subr.mxu0 0.0
      %2152 = vmatpush2.msra.mxu0 0.0
      %2153 = vmatprep.mubr.f32.mxu0 0.0
      %2154 = vmatmul.mubr.f32.gmra.mxu0 %v2022
      %v2155 = vpop.f32.mrf.mxu0
      %v2156 = vadd.f32 0.0, %v2155
      %v2157 = vpop.f32.mrf.mxu0
      %2158 = vmatprep.mubr.f32.mxu0 0.0
      %2159 = vmatmul.mubr.f32.gmra.mxu0 %v2024
      %v2160 = vpop.f32.mrf.mxu0
      %v2161 = vadd.f32 0.0, %v2160
      %v2162 = vpop.f32.mrf.mxu0
      %2163 = vmatprep.mubr.f32.mxu0 0.0
      %2164 = vmatmul.mubr.f32.gmra.mxu0 %v2026
      %v2165 = vpop.f32.mrf.mxu0
      %v2166 = vadd.f32 0.0, %v2165
      %v2167 = vpop.f32.mrf.mxu0
      %2168 = vmatprep.mubr.f32.mxu0 0.0
      %2169 = vmatmul.mubr.f32.gmra.mxu0 %v2028
      %v2170 = vpop.f32.mrf.mxu0
      %v2171 = vadd.f32 0.0, %v2170
      %v2172 = vpop.f32.mrf.mxu0
      %2173 = vmatprep.mubr.f32.mxu0 0.0
      %2174 = vmatmul.mubr.f32.gmra.mxu0 %v2030
      %v2175 = vpop.f32.mrf.mxu0
      %v2176 = vadd.f32 0.0, %v2175
      %v2177 = vpop.f32.mrf.mxu0
      %2178 = vmatprep.mubr.f32.mxu0 0.0
      %2179 = vmatmul.mubr.f32.gmra.mxu0 %v2032
      %v2180 = vpop.f32.mrf.mxu0
      %v2181 = vadd.f32 0.0, %v2180
      %v2182 = vpop.f32.mrf.mxu0
      %2183 = vmatprep.mubr.f32.mxu0 0.0
      %2184 = vmatmul.mubr.f32.gmra.mxu0 %v2034
      %v2185 = vpop.f32.mrf.mxu0
      %v2186 = vadd.f32 0.0, %v2185
      %v2187 = vpop.f32.mrf.mxu0
      %2188 = vmatprep.mubr.f32.mxu0 0.0
      %2189 = vmatmul.mubr.f32.gmra.mxu0 %v2036
      %v2190 = vpop.f32.mrf.mxu0
      %v2191 = vadd.f32 0.0, %v2190
      %v2192 = vpop.f32.mrf.mxu0
      %2193 = vmatprep.mubr.f32.mxu0 0.0
      %2194 = vmatmul.mubr.f32.gmra.mxu0 %v2038
      %v2195 = vpop.f32.mrf.mxu0
      %v2196 = vadd.f32 0.0, %v2195
      %v2197 = vpop.f32.mrf.mxu0
      %2198 = vmatprep.mubr.f32.mxu0 0.0
      %2199 = vmatmul.mubr.f32.gmra.mxu0 %v2040
      %v2200 = vpop.f32.mrf.mxu0
      %v2201 = vadd.f32 0.0, %v2200
      %v2202 = vpop.f32.mrf.mxu0
      %2203 = vmatprep.mubr.f32.mxu0 0.0
      %2204 = vmatmul.mubr.f32.gmra.mxu0 %v2042
      %v2205 = vpop.f32.mrf.mxu0
      %v2206 = vadd.f32 0.0, %v2205
      %v2207 = vpop.f32.mrf.mxu0
      %2208 = vmatprep.mubr.f32.mxu0 0.0
      %2209 = vmatmul.mubr.f32.gmra.mxu0 %v2044
      %v2210 = vpop.f32.mrf.mxu0
      %v2211 = vadd.f32 0.0, %v2210
      %v2212 = vpop.f32.mrf.mxu0
      %2213 = vmatprep.mubr.f32.mxu0 0.0
      %2214 = vmatmul.mubr.f32.gmra.mxu0 %v2046
      %v2215 = vpop.f32.mrf.mxu0
      %v2216 = vadd.f32 0.0, %v2215
      %v2217 = vpop.f32.mrf.mxu0
      %2218 = vmatprep.mubr.f32.mxu0 0.0
      %2219 = vmatmul.mubr.f32.gmra.mxu0 %v2048
      %v2220 = vpop.f32.mrf.mxu0
      %v2221 = vadd.f32 0.0, %v2220
      %v2222 = vpop.f32.mrf.mxu0
      %2223 = vmatprep.mubr.f32.mxu0 0.0
      %2224 = vmatmul.mubr.f32.gmra.mxu0 %v2050
      %v2225 = vpop.f32.mrf.mxu0
      %v2226 = vadd.f32 0.0, %v2225
      %v2227 = vpop.f32.mrf.mxu0
      %2228 = vmatprep.mubr.f32.mxu0 0.0
      %2229 = vmatmul.mubr.f32.gmra.mxu0 %v2052
      %v2230 = vpop.f32.mrf.mxu0
      %v2231 = vadd.f32 0.0, %v2230
      %v2232 = vpop.f32.mrf.mxu0
      %2233 = vmatprep.mubr.f32.mxu0 0.0
      %2234 = vmatmul.mubr.f32.gmra.mxu0 %v2054
      %v2235 = vpop.f32.mrf.mxu0
      %v2236 = vadd.f32 0.0, %v2235
      %v2237 = vpop.f32.mrf.mxu0
      %2238 = vmatprep.mubr.f32.mxu0 0.0
      %2239 = vmatmul.mubr.f32.gmra.mxu0 %v2056
      %v2240 = vpop.f32.mrf.mxu0
      %v2241 = vadd.f32 0.0, %v2240
      %v2242 = vpop.f32.mrf.mxu0
      %2243 = vmatprep.mubr.f32.mxu0 0.0
      %2244 = vmatmul.mubr.f32.gmra.mxu0 %v2058
      %v2245 = vpop.f32.mrf.mxu0
      %v2246 = vadd.f32 0.0, %v2245
      %v2247 = vpop.f32.mrf.mxu0
      %2248 = vmatprep.mubr.f32.mxu0 0.0
      %2249 = vmatmul.mubr.f32.gmra.mxu0 %v2060
      %v2250 = vpop.f32.mrf.mxu0
      %v2251 = vadd.f32 0.0, %v2250
      %v2252 = vpop.f32.mrf.mxu0
      %2253 = vmatprep.mubr.f32.mxu0 0.0
      %2254 = vmatmul.mubr.f32.gmra.mxu0 %v2062
      %v2255 = vpop.f32.mrf.mxu0
      %v2256 = vadd.f32 0.0, %v2255
      %v2257 = vpop.f32.mrf.mxu0
      %2258 = vmatprep.mubr.f32.mxu0 0.0
      %2259 = vmatmul.mubr.f32.gmra.mxu0 %v2064
      %v2260 = vpop.f32.mrf.mxu0
      %v2261 = vadd.f32 0.0, %v2260
      %v2262 = vpop.f32.mrf.mxu0
      %2263 = vmatprep.mubr.f32.mxu0 0.0
      %2264 = vmatmul.mubr.f32.gmra.mxu0 %v2066
      %v2265 = vpop.f32.mrf.mxu0
      %v2266 = vadd.f32 0.0, %v2265
      %v2267 = vpop.f32.mrf.mxu0
      %2268 = vmatprep.mubr.f32.mxu0 0.0
      %2269 = vmatmul.mubr.f32.gmra.mxu0 %v2068
      %v2270 = vpop.f32.mrf.mxu0
      %v2271 = vadd.f32 0.0, %v2270
      %v2272 = vpop.f32.mrf.mxu0
      %2273 = vmatprep.mubr.f32.mxu0 0.0
      %2274 = vmatmul.mubr.f32.gmra.mxu0 %v2070
      %v2275 = vpop.f32.mrf.mxu0
      %v2276 = vadd.f32 0.0, %v2275
      %v2277 = vpop.f32.mrf.mxu0
      %2278 = vmatprep.mubr.f32.mxu0 0.0
      %2279 = vmatmul.mubr.f32.gmra.mxu0 %v2072
      %v2280 = vpop.f32.mrf.mxu0
      %v2281 = vadd.f32 0.0, %v2280
      %v2282 = vpop.f32.mrf.mxu0
      %2283 = vmatprep.mubr.f32.mxu0 0.0
      %2284 = vmatmul.mubr.f32.gmra.mxu0 %v2074
      %v2285 = vpop.f32.mrf.mxu0
      %v2286 = vadd.f32 0.0, %v2285
      %v2287 = vpop.f32.mrf.mxu0
      %2288 = vmatprep.mubr.f32.mxu0 0.0
      %2289 = vmatmul.mubr.f32.gmra.mxu0 %v2076
      %v2290 = vpop.f32.mrf.mxu0
      %v2291 = vadd.f32 0.0, %v2290
      %v2292 = vpop.f32.mrf.mxu0
      %2293 = vmatprep.mubr.f32.mxu0 0.0
      %2294 = vmatmul.mubr.f32.gmra.mxu0 %v2078
      %v2295 = vpop.f32.mrf.mxu0
      %v2296 = vadd.f32 0.0, %v2295
      %v2297 = vpop.f32.mrf.mxu0
      %2298 = vmatprep.mubr.f32.mxu0 0.0
      %2299 = vmatmul.mubr.f32.gmra.mxu0 %v2080
      %v2300 = vpop.f32.mrf.mxu0
      %v2301 = vadd.f32 0.0, %v2300
      %v2302 = vpop.f32.mrf.mxu0
      %2303 = vmatprep.mubr.f32.mxu0 0.0
      %2304 = vmatmul.mubr.f32.gmra.mxu0 %v2082
      %v2305 = vpop.f32.mrf.mxu0
      %v2306 = vadd.f32 0.0, %v2305
      %v2307 = vpop.f32.mrf.mxu0
      %2308 = vmatprep.mubr.f32.mxu0 0.0
      %2309 = vmatmul.mubr.f32.gmra.mxu0 %v2084
      %v2310 = vpop.f32.mrf.mxu0
      %v2311 = vadd.f32 0.0, %v2310
      %v2312 = vpop.f32.mrf.mxu0
      %2313 = vdwg.mxu0
      %v2314 = vadd.f32 %v1907, %v2156
      %v2315 = vadd.f32 %v1908, %v2161
      %v2316 = vadd.f32 %v1909, %v2166
      %v2317 = vadd.f32 %v1910, %v2171
      %v2318 = vadd.f32 %v1911, %v2176
      %v2319 = vadd.f32 %v1912, %v2181
      %v2320 = vadd.f32 %v1913, %v2186
      %v2321 = vadd.f32 %v1914, %v2191
      %v2322 = vadd.f32 %v1915, %v2196
      %v2323 = vadd.f32 %v1916, %v2201
      %v2324 = vadd.f32 %v1917, %v2206
      %v2325 = vadd.f32 %v1918, %v2211
      %v2326 = vadd.f32 %v1919, %v2216
      %v2327 = vadd.f32 %v1920, %v2221
      %v2328 = vadd.f32 %v1921, %v2226
      %v2329 = vadd.f32 %v1922, %v2231
      %v2330 = vadd.f32 %v1923, %v2236
      %v2331 = vadd.f32 %v1924, %v2241
      %v2332 = vadd.f32 %v1925, %v2246
      %v2333 = vadd.f32 %v1926, %v2251
      %v2334 = vadd.f32 %v1927, %v2256
      %v2335 = vadd.f32 %v1928, %v2261
      %v2336 = vadd.f32 %v1929, %v2266
      %v2337 = vadd.f32 %v1930, %v2271
      %v2338 = vadd.f32 %v1931, %v2276
      %v2339 = vadd.f32 %v1932, %v2281
      %v2340 = vadd.f32 %v1933, %v2286
      %v2341 = vadd.f32 %v1934, %v2291
      %v2342 = vadd.f32 %v1935, %v2296
      %v2343 = vadd.f32 %v1936, %v2301
      %v2344 = vadd.f32 %v1937, %v2306
      %v2345 = vadd.f32 %v1938, %v2311
      %vm2346 = vcmask 64512
      %2347 = vst.msk [vmem:[%s170] sm:$0xff] %vm2346, %v2314
      %2348 = vst.msk [vmem:[%s170 + $0x8] sm:$0xff] %vm2346, %v2315
      %2349 = vst.msk [vmem:[%s170 + $0x10] sm:$0xff] %vm2346, %v2316
      %2350 = vst.msk [vmem:[%s170 + $0x18] sm:$0xff] %vm2346, %v2317
      %2351 = vst.msk [vmem:[%s170 + $0x20] sm:$0xff] %vm2346, %v2318
      %2352 = vst.msk [vmem:[%s170 + $0x28] sm:$0xff] %vm2346, %v2319
      %2353 = vst.msk [vmem:[%s170 + $0x30] sm:$0xff] %vm2346, %v2320
      %2354 = vst.msk [vmem:[%s170 + $0x38] sm:$0xff] %vm2346, %v2321
      %2355 = vst.msk [vmem:[%s170 + $0x40] sm:$0xff] %vm2346, %v2322
      %2356 = vst.msk [vmem:[%s170 + $0x48] sm:$0xff] %vm2346, %v2323
      %2357 = vst.msk [vmem:[%s170 + $0x50] sm:$0xff] %vm2346, %v2324
      %2358 = vst.msk [vmem:[%s170 + $0x58] sm:$0xff] %vm2346, %v2325
      %2359 = vst.msk [vmem:[%s170 + $0x60] sm:$0xff] %vm2346, %v2326
      %2360 = vst.msk [vmem:[%s170 + $0x68] sm:$0xff] %vm2346, %v2327
      %2361 = vst.msk [vmem:[%s170 + $0x70] sm:$0xff] %vm2346, %v2328
      %2362 = vst.msk [vmem:[%s170 + $0x78] sm:$0xff] %vm2346, %v2329
      %2363 = vst.msk [vmem:[%s170 + $0x80] sm:$0xff] %vm2346, %v2330
      %2364 = vst.msk [vmem:[%s170 + $0x88] sm:$0xff] %vm2346, %v2331
      %2365 = vst.msk [vmem:[%s170 + $0x90] sm:$0xff] %vm2346, %v2332
      %2366 = vst.msk [vmem:[%s170 + $0x98] sm:$0xff] %vm2346, %v2333
      %2367 = vst.msk [vmem:[%s170 + $0xa0] sm:$0xff] %vm2346, %v2334
      %2368 = vst.msk [vmem:[%s170 + $0xa8] sm:$0xff] %vm2346, %v2335
      %2369 = vst.msk [vmem:[%s170 + $0xb0] sm:$0xff] %vm2346, %v2336
      %2370 = vst.msk [vmem:[%s170 + $0xb8] sm:$0xff] %vm2346, %v2337
      %2371 = vst.msk [vmem:[%s170 + $0xc0] sm:$0xff] %vm2346, %v2338
      %2372 = vst.msk [vmem:[%s170 + $0xc8] sm:$0xff] %vm2346, %v2339
      %2373 = vst.msk [vmem:[%s170 + $0xd0] sm:$0xff] %vm2346, %v2340
      %2374 = vst.msk [vmem:[%s170 + $0xd8] sm:$0xff] %vm2346, %v2341
      %2375 = vst.msk [vmem:[%s170 + $0xe0] sm:$0xff] %vm2346, %v2342
      %2376 = vst.msk [vmem:[%s170 + $0xe8] sm:$0xff] %vm2346, %v2343
      %2377 = vst.msk [vmem:[%s170 + $0xf0] sm:$0xff] %vm2346, %v2344
      %2378 = vst.msk [vmem:[%s170 + $0xf8] sm:$0xff] %vm2346, %v2345
      %p2379 = scmp.lt.s32.totalorder %s14, 1
      %s2380 = scalar_select %p2379, %s14, 1
      %s2381 = smul.addr %s2380, 32
      %s2382 = smul.addr %s2381, 8
      %s2383 = scalar_lea.vmem %s3, %s2382
      // Predicated region
      $region33: #{tpu_custom_call.1} parent=31 // pred_check
        %p2384 = pneg %p100
      $region34: #{tpu_custom_call.1} parent=31 // pred_check_branch
        %2386 = sbr.rel (%p2384) target = $region36
      $region35: #{tpu_custom_call.1} parent=31 // pred_region
        _
      $region36: #{tpu_custom_call.1} parent=31 // pred_fallthru
        _
    $region32: #{tpu_custom_call.1} parent=5 // pred_fallthru
      _
    %p2387 = scmp.le.s32.totalorder 2, %s9
    // Predicated region
    $region37: #{tpu_custom_call.1} parent=5 // pred_check
      %p2388 = pneg %p2387
    $region38: #{tpu_custom_call.1} parent=5 // pred_check_branch
      %2390 = sbr.rel (%p2388) target = $region40
    $region39: #{tpu_custom_call.1} parent=5 // pred_region
      %s2391 = ssub.s32 %s9, 2
      // Predicated region
      $region41: #{tpu_custom_call.1} parent=39 // pred_check
        %p2392 = pneg %p106
      $region42: #{tpu_custom_call.1} parent=39 // pred_check_branch
        %2394 = sbr.rel (%p2392) target = $region44
      $region43: #{tpu_custom_call.1} parent=39 // pred_region
        %p2395 = scmp.lt.s32.totalorder %s15, 1
        %s2396 = scalar_select %p2395, %s15, 1
        %s2397 = smul.addr %s2396, 32
        %s2398 = smul.addr %s2397, 8
        %s2399 = scalar_lea.vmem %s3, %s2398
      $region44: #{tpu_custom_call.1} parent=39 // pred_fallthru
        _
    $region40: #{tpu_custom_call.1} parent=5 // pred_fallthru
      _
  $region6: #{tpu_custom_call.1} parent=0 // loop_footer
    %s13 = sadd.s32 1, %s9
  $region7: #{tpu_custom_call.1} parent=0 // loop_footer_branch
    %8 = sbr.rel target = $region3
  $region8: #{tpu_custom_call.1} parent=0 // loop_exit
    _

</llo_original>
